<compile_context>
chip_gen: v7x
topology: tpu7x:2x2x1
jax: 0.10.0
libtpu: 0.0.40
codegen_flags: <defaults>
</compile_context>

<pallas_src>
from collections import OrderedDict
import functools

import jax
import jax.numpy as jnp
import numpy as np
from jax.experimental import pallas as pl
from jax.experimental.pallas import tpu as pltpu


def _round_up(x, m):
    return (x + m - 1) // m * m


def _cdiv(a, b):
    return (a + b - 1) // b


def _s2d_conv_kernel(a_ref, ov_ref, w_ref, bias_ref, o_ref, *, offsets):
    """One grid step: 3x3/stride-2 conv on a tm-row block of s2d-packed input.

    a_ref    : (tm, K)      main input block (bf16), read once from HBM
    ov_ref   : (1, ov, K)   first `ov` rows of block m+1 (overlap, bf16)
    w_ref    : (4, K, Cout) per-tap weight slabs, frozen-BN scale folded (bf16)
    bias_ref : (1, Cout)    folded-BN bias (f32)
    o_ref    : (tm, Cout)   output block (bf16), unpadded lane dim
    """
    tm = a_ref.shape[0]
    cout = o_ref.shape[1]
    # Overlap-extended block: only `ov` extra rows, not a duplicate block.
    ab = jnp.concatenate([a_ref[...], ov_ref[0]], axis=0)          # (tm + ov, K)
    acc = jnp.zeros((tm, cout), jnp.float32)
    for t, off in enumerate(offsets):                               # 4 static taps
        acc = acc + jnp.dot(ab[off:off + tm, :], w_ref[t],
                            preferred_element_type=jnp.float32)     # MXU, f32 acc
    o_ref[...] = jnp.maximum(acc + bias_ref[...], 0.0).astype(o_ref.dtype)


def conv3x3s2_bn_relu_nhwc(x, w4, bias_row, out_ch):
    """3x3 stride-2 pad-1 conv (frozen BN folded in) + ReLU.  NHWC bf16 in/out."""
    N, H, W, C = x.shape
    OH = (H - 1) // 2 + 1
    OW = (W - 1) // 2 + 1
    Hq, Wq = OH + 1, OW + 1            # s2d cell grid (includes the padding ring)
    Hp, Wp = 2 * Hq, 2 * Wq
    K = 4 * C

    # Pad and space-to-depth pack once (same HBM footprint as the input).
    xp = jnp.pad(x, ((0, 0), (1, Hp - H - 1), (1, Wp - W - 1), (0, 0)))
    s = xp.reshape(N, Hq, 2, Wq, 2, C).transpose(0, 1, 3, 2, 4, 5)
    s = s.reshape(N * Hq * Wq, K)

    M = N * Hq * Wq
    ov = _round_up(Wq + 1, 16)         # overlap rows a block needs beyond itself
    if M >= 1024:
        tm = 512                       # big tiles amortize per-step overhead
    elif M >= 256:
        tm = _round_up(_cdiv(M, 2), 16)  # >= 2 blocks keeps both v7x TCs busy
    else:
        tm = _round_up(M, 16)
    tm = max(tm, ov)
    nm = _cdiv(M, tm)
    Mp = nm * tm

    # Pad so every block + its ov-row overlap window is in bounds, then carve the
    # small per-block overlap slabs (~ov/tm of the input, each row read once).
    s_pad = jnp.pad(s, ((0, (nm + 1) * tm - M), (0, 0)))
    ovl = s_pad.reshape(nm + 1, tm, K)[1:, :ov, :]                  # (nm, ov, K)

    offsets = (0, 1, Wq, Wq + 1)       # cell taps (qi,qj) -> row shift qi*Wq + qj

    flops = 2 * Mp * K * out_ch * 4
    bytes_accessed = (Mp * K + nm * ov * K + 4 * K * out_ch + Mp * out_ch) * 2 + 4 * out_ch

    out = pl.pallas_call(
        functools.partial(_s2d_conv_kernel, offsets=offsets),
        out_shape=jax.ShapeDtypeStruct((Mp, out_ch), jnp.bfloat16),
        grid_spec=pltpu.PrefetchScalarGridSpec(
            num_scalar_prefetch=0,
            grid=(nm,),                                             # no K reduction axis
            in_specs=[
                pl.BlockSpec((tm, K), lambda m: (m, 0)),            # input block (read once)
                pl.BlockSpec((1, ov, K), lambda m: (m, 0, 0)),      # overlap rows of block m+1
                pl.BlockSpec((4, K, out_ch), lambda m: (0, 0, 0)),  # weights (constant index)
                pl.BlockSpec((1, out_ch), lambda m: (0, 0)),        # folded-BN bias
            ],
            out_specs=pl.BlockSpec((tm, out_ch), lambda m: (m, 0)),  # unpadded lanes
        ),
        compiler_params=pltpu.CompilerParams(dimension_semantics=("parallel",)),
        cost_estimate=pl.CostEstimate(flops=flops, transcendentals=0,
                                      bytes_accessed=bytes_accessed),
    )(s_pad, ovl, w4, bias_row)

    y = out[:M].reshape(N, Hq, Wq, out_ch)[:, :OH, :OW, :]
    return y                                                        # NHWC bf16


class BackboneBasePallas:
    """JAX/Pallas equivalent of BackboneBase.forward."""

    def __init__(self, in_channels=3, stage_channels=(8, 16, 32, 64),
                 return_interm_layers=False, key=None):
        if key is None:
            key = jax.random.PRNGKey(0)
        if return_interm_layers:
            self.return_layers = {'layer1': '0', 'layer2': '1', 'layer3': '2', 'layer4': '3'}
        else:
            self.return_layers = {'layer4': '0'}
        self.num_channels = stage_channels[-1]

        eps = 1e-5
        self.params = []       # (w4 bf16 (4, 4*Cin, Cout), bias f32 (1, Cout), cout)
        self.ref_params = []   # (folded conv weight f32 (Cout, Cin, 3, 3), bias f32 (Cout,))
        cin = in_channels
        keys = jax.random.split(key, len(stage_channels))
        for kk, cout in zip(keys, stage_channels):
            k1, k2, k3, k4, k5 = jax.random.split(kk, 5)
            w = jax.random.normal(k1, (cout, cin, 3, 3), jnp.float32) * 0.1
            gamma = jax.random.uniform(k2, (cout,), jnp.float32, minval=0.5, maxval=1.5)
            beta = jax.random.normal(k3, (cout,), jnp.float32) * 0.1
            mean = jax.random.normal(k4, (cout,), jnp.float32) * 0.1
            var = jax.random.uniform(k5, (cout,), jnp.float32, minval=0.5, maxval=1.5)
            scale = gamma / jnp.sqrt(var + eps)          # frozen-BN folded affine
            bias = beta - mean * scale
            w_fold = w * scale[:, None, None, None]      # BN scale folded into conv weight

            # Pack the 9 conv taps into 4 per-quadrant (4*Cin, Cout) slabs, once at init.
            w_np = np.asarray(w_fold, np.float32)
            w4 = np.zeros((4, 4 * cin, cout), np.float32)
            for qi in range(2):
                for qj in range(2):
                    t = 2 * qi + qj
                    for a in range(2):
                        for b in range(2):
                            di, dj = 2 * qi + a, 2 * qj + b
                            if di < 3 and dj < 3:
                                w4[t, (2 * a + b) * cin:(2 * a + b + 1) * cin, :] = \
                                    w_np[:, :, di, dj].T
            bias_row = np.asarray(bias, np.float32)[None, :]

            self.params.append((jnp.asarray(w4, jnp.bfloat16),
                                jnp.asarray(bias_row, jnp.float32), cout))
            self.ref_params.append((w_fold, bias))
            cin = cout

        self._jit_forward = jax.jit(self._forward_impl)

    def _forward_impl(self, tensor):
        x = jnp.transpose(tensor, (0, 2, 3, 1)).astype(jnp.bfloat16)   # NCHW -> NHWC once
        outs = []
        for idx, (w4, bias_row, cout) in enumerate(self.params):
            x = conv3x3s2_bn_relu_nhwc(x, w4, bias_row, cout)
            if f"layer{idx + 1}" in self.return_layers:
                outs.append(jnp.transpose(x, (0, 3, 1, 2)).astype(jnp.float32))
        return tuple(outs)

    def forward(self, tensor):
        outs = self._jit_forward(tensor)
        names = [self.return_layers[f"layer{i + 1}"] for i in range(len(self.params))
                 if f"layer{i + 1}" in self.return_layers]
        return OrderedDict(zip(names, outs))

    def reference_forward(self, tensor):
        """Pure-JAX (lax.conv) reference with the same bf16/f32 numerics chain."""
        x = jnp.transpose(tensor, (0, 2, 3, 1)).astype(jnp.bfloat16)
        xs = OrderedDict()
        for idx, (w_fold, bias_vec) in enumerate(self.ref_params):
            y = jax.lax.conv_general_dilated(
                x, w_fold.astype(jnp.bfloat16),
                window_strides=(2, 2), padding=((1, 1), (1, 1)),
                dimension_numbers=('NHWC', 'OIHW', 'NHWC'),
                preferred_element_type=jnp.float32)
            y = jnp.maximum(y + bias_vec[None, None, None, :], 0.0)
            x = y.astype(jnp.bfloat16)
            name = f"layer{idx + 1}"
            if name in self.return_layers:
                xs[self.return_layers[name]] = jnp.transpose(x, (0, 3, 1, 2)).astype(jnp.float32)
        return xs


if __name__ == "__main__":
    x = jax.random.normal(jax.random.PRNGKey(0), (2, 3, 16, 16), jnp.float32)   # NCHW, like PyTorch

    backbone = BackboneBasePallas(in_channels=3,
                                  stage_channels=(8, 16, 32, 64),
                                  return_interm_layers=False,
                                  key=jax.random.PRNGKey(0))
    xs = backbone.forward(x)
    for v in xs.values():
        jax.block_until_ready(v)

    # Return semantics: single entry '0', num_channels channels, 16 -> 1 spatial.
    assert list(xs.keys()) == ['0']
    assert xs['0'].shape == (2, backbone.num_channels, 1, 1)

    # Numerical check against a pure-JAX conv reference (same bf16/f32 chain).
    ref = backbone.reference_forward(x)
    np.testing.assert_allclose(np.asarray(xs['0']), np.asarray(ref['0']),
                               rtol=5e-2, atol=5e-2)
    print("KERNEL_OK")
</pallas_src>

<mosaic_0001>
module attributes {stable_mosaic.version = 11 : i64} {
  func.func @_s2d_conv_kernel(%arg0: i32, %arg1: memref<176x12xbf16, #tpu.memory_space<vmem>>, %arg2: memref<1x16x12xbf16, #tpu.memory_space<vmem>>, %arg3: memref<4x12x8xbf16, #tpu.memory_space<vmem>>, %arg4: memref<1x8xf32, #tpu.memory_space<vmem>>, %arg5: memref<176x8xbf16, #tpu.memory_space<vmem>>) attributes {dimension_semantics = [#tpu.dimension_semantics<parallel>], iteration_bounds = array<i64: 1>, scalar_prefetch = 0 : i64, scratch_operands = 0 : i64, tpu.core_type = #tpu.core_type<tc>, window_params = [{transform_indices = @transform_0, window_bounds = array<i64: 176, 12>}, {transform_indices = @transform_1, window_bounds = array<i64: 1, 16, 12>}, {pipeline_mode = #tpu.pipeline_mode<synchronous>, transform_indices = @transform_2, window_bounds = array<i64: 4, 12, 8>}, {pipeline_mode = #tpu.pipeline_mode<synchronous>, transform_indices = @transform_3, window_bounds = array<i64: 1, 8>}, {transform_indices = @transform_4, window_bounds = array<i64: 176, 8>}]} {
    %c0 = arith.constant 0 : index
    %c0_0 = arith.constant 0 : index
    %0 = vector.load %arg1[%c0, %c0_0] : memref<176x12xbf16, #tpu.memory_space<vmem>>, vector<176x12xbf16>
    %c0_1 = arith.constant 0 : index
    %c0_2 = arith.constant 0 : index
    %c0_3 = arith.constant 0 : index
    %1 = vector.load %arg2[%c0_1, %c0_2, %c0_3] : memref<1x16x12xbf16, #tpu.memory_space<vmem>>, vector<1x16x12xbf16>
    %2 = vector.shape_cast %1 : vector<1x16x12xbf16> to vector<16x12xbf16>
    %3 = tpu.concatenate %0, %2 in 0 : vector<176x12xbf16>, vector<16x12xbf16> -> vector<192x12xbf16>
    %cst = arith.constant 0.000000e+00 : f32
    %4 = vector.broadcast %cst : f32 to vector<176x8xf32>
    %5 = vector.extract_strided_slice %3 {offsets = [0, 0], sizes = [176, 12], strides = [1, 1]} : vector<192x12xbf16> to vector<176x12xbf16>
    %c0_4 = arith.constant 0 : index
    %c0_5 = arith.constant 0 : index
    %c0_6 = arith.constant 0 : index
    %6 = vector.load %arg3[%c0_4, %c0_5, %c0_6] : memref<4x12x8xbf16, #tpu.memory_space<vmem>>, vector<1x12x8xbf16>
    %7 = vector.shape_cast %6 : vector<1x12x8xbf16> to vector<12x8xbf16>
    %cst_7 = arith.constant dense<0.000000e+00> : vector<176x8xf32>
    %8 = tpu.matmul %5, %7, %cst_7 {dimension_numbers = #tpu.dot_dimension_numbers<[1], [0], [0], [1], [0, 0, 1, 1], [], []>} : vector<176x12xbf16>, vector<12x8xbf16>, vector<176x8xf32> -> vector<176x8xf32>
    %9 = arith.addf %4, %8 : vector<176x8xf32>
    %10 = vector.extract_strided_slice %3 {offsets = [1, 0], sizes = [176, 12], strides = [1, 1]} : vector<192x12xbf16> to vector<176x12xbf16>
    %c1 = arith.constant 1 : index
    %c0_8 = arith.constant 0 : index
    %c0_9 = arith.constant 0 : index
    %11 = vector.load %arg3[%c1, %c0_8, %c0_9] : memref<4x12x8xbf16, #tpu.memory_space<vmem>>, vector<1x12x8xbf16>
    %12 = vector.shape_cast %11 : vector<1x12x8xbf16> to vector<12x8xbf16>
    %cst_10 = arith.constant dense<0.000000e+00> : vector<176x8xf32>
    %13 = tpu.matmul %10, %12, %cst_10 {dimension_numbers = #tpu.dot_dimension_numbers<[1], [0], [0], [1], [0, 0, 1, 1], [], []>} : vector<176x12xbf16>, vector<12x8xbf16>, vector<176x8xf32> -> vector<176x8xf32>
    %14 = arith.addf %9, %13 : vector<176x8xf32>
    %15 = vector.extract_strided_slice %3 {offsets = [9, 0], sizes = [176, 12], strides = [1, 1]} : vector<192x12xbf16> to vector<176x12xbf16>
    %c2 = arith.constant 2 : index
    %c0_11 = arith.constant 0 : index
    %c0_12 = arith.constant 0 : index
    %16 = vector.load %arg3[%c2, %c0_11, %c0_12] : memref<4x12x8xbf16, #tpu.memory_space<vmem>>, vector<1x12x8xbf16>
    %17 = vector.shape_cast %16 : vector<1x12x8xbf16> to vector<12x8xbf16>
    %cst_13 = arith.constant dense<0.000000e+00> : vector<176x8xf32>
    %18 = tpu.matmul %15, %17, %cst_13 {dimension_numbers = #tpu.dot_dimension_numbers<[1], [0], [0], [1], [0, 0, 1, 1], [], []>} : vector<176x12xbf16>, vector<12x8xbf16>, vector<176x8xf32> -> vector<176x8xf32>
    %19 = arith.addf %14, %18 : vector<176x8xf32>
    %20 = vector.extract_strided_slice %3 {offsets = [10, 0], sizes = [176, 12], strides = [1, 1]} : vector<192x12xbf16> to vector<176x12xbf16>
    %c3 = arith.constant 3 : index
    %c0_14 = arith.constant 0 : index
    %c0_15 = arith.constant 0 : index
    %21 = vector.load %arg3[%c3, %c0_14, %c0_15] : memref<4x12x8xbf16, #tpu.memory_space<vmem>>, vector<1x12x8xbf16>
    %22 = vector.shape_cast %21 : vector<1x12x8xbf16> to vector<12x8xbf16>
    %cst_16 = arith.constant dense<0.000000e+00> : vector<176x8xf32>
    %23 = tpu.matmul %20, %22, %cst_16 {dimension_numbers = #tpu.dot_dimension_numbers<[1], [0], [0], [1], [0, 0, 1, 1], [], []>} : vector<176x12xbf16>, vector<12x8xbf16>, vector<176x8xf32> -> vector<176x8xf32>
    %24 = arith.addf %19, %23 : vector<176x8xf32>
    %c0_17 = arith.constant 0 : index
    %c0_18 = arith.constant 0 : index
    %25 = vector.load %arg4[%c0_17, %c0_18] : memref<1x8xf32, #tpu.memory_space<vmem>>, vector<1x8xf32>
    %26 = vector.broadcast %25 : vector<1x8xf32> to vector<176x8xf32>
    %27 = arith.addf %24, %26 : vector<176x8xf32>
    %cst_19 = arith.constant 0.000000e+00 : f32
    %28 = vector.broadcast %cst_19 : f32 to vector<176x8xf32>
    %29 = arith.maximumf %27, %28 : vector<176x8xf32>
    %30 = arith.truncf %29 : vector<176x8xf32> to vector<176x8xbf16>
    %c0_20 = arith.constant 0 : index
    %c0_21 = arith.constant 0 : index
    %31 = vector.load %arg5[%c0_20, %c0_21] : memref<176x8xbf16, #tpu.memory_space<vmem>>, vector<176x8xbf16>
    tpu.vector_store %arg5[%c0_20, %c0_21], %30 {strides = array<i32>} : memref<176x8xbf16, #tpu.memory_space<vmem>>, vector<176x8xbf16>,
    return
  }
  func.func @transform_0(%arg0: i32) -> (i32, i32) {
    %c0_i32 = arith.constant 0 : i32
    %c0_i32_0 = arith.constant 0 : i32
    return %arg0, %c0_i32 : i32, i32
  }
  func.func @transform_1(%arg0: i32) -> (i32, i32, i32) {
    %c0_i32 = arith.constant 0 : i32
    %c0_i32_0 = arith.constant 0 : i32
    %c0_i32_1 = arith.constant 0 : i32
    return %arg0, %c0_i32, %c0_i32_0 : i32, i32, i32
  }
  func.func @transform_2(%arg0: i32) -> (i32, i32, i32) {
    %c0_i32 = arith.constant 0 : i32
    %c0_i32_0 = arith.constant 0 : i32
    %c0_i32_1 = arith.constant 0 : i32
    %c0_i32_2 = arith.constant 0 : i32
    return %c0_i32, %c0_i32_0, %c0_i32_1 : i32, i32, i32
  }
  func.func @transform_3(%arg0: i32) -> (i32, i32) {
    %c0_i32 = arith.constant 0 : i32
    %c0_i32_0 = arith.constant 0 : i32
    %c0_i32_1 = arith.constant 0 : i32
    return %c0_i32, %c0_i32_0 : i32, i32
  }
  func.func @transform_4(%arg0: i32) -> (i32, i32) {
    %c0_i32 = arith.constant 0 : i32
    %c0_i32_0 = arith.constant 0 : i32
    return %arg0, %c0_i32 : i32, i32
  }
}

module attributes {stable_mosaic.version = 11 : i64} {
  func.func @_s2d_conv_kernel(%arg0: i32, %arg1: memref<64x32xbf16, #tpu.memory_space<vmem>>, %arg2: memref<1x16x32xbf16, #tpu.memory_space<vmem>>, %arg3: memref<4x32x16xbf16, #tpu.memory_space<vmem>>, %arg4: memref<1x16xf32, #tpu.memory_space<vmem>>, %arg5: memref<64x16xbf16, #tpu.memory_space<vmem>>) attributes {dimension_semantics = [#tpu.dimension_semantics<parallel>], iteration_bounds = array<i64: 1>, scalar_prefetch = 0 : i64, scratch_operands = 0 : i64, tpu.core_type = #tpu.core_type<tc>, window_params = [{transform_indices = @transform_0, window_bounds = array<i64: 64, 32>}, {transform_indices = @transform_1, window_bounds = array<i64: 1, 16, 32>}, {pipeline_mode = #tpu.pipeline_mode<synchronous>, transform_indices = @transform_2, window_bounds = array<i64: 4, 32, 16>}, {pipeline_mode = #tpu.pipeline_mode<synchronous>, transform_indices = @transform_3, window_bounds = array<i64: 1, 16>}, {transform_indices = @transform_4, window_bounds = array<i64: 64, 16>}]} {
    %c0 = arith.constant 0 : index
    %c0_0 = arith.constant 0 : index
    %0 = vector.load %arg1[%c0, %c0_0] : memref<64x32xbf16, #tpu.memory_space<vmem>>, vector<64x32xbf16>
    %c0_1 = arith.constant 0 : index
    %c0_2 = arith.constant 0 : index
    %c0_3 = arith.constant 0 : index
    %1 = vector.load %arg2[%c0_1, %c0_2, %c0_3] : memref<1x16x32xbf16, #tpu.memory_space<vmem>>, vector<1x16x32xbf16>
    %2 = vector.shape_cast %1 : vector<1x16x32xbf16> to vector<16x32xbf16>
    %3 = tpu.concatenate %0, %2 in 0 : vector<64x32xbf16>, vector<16x32xbf16> -> vector<80x32xbf16>
    %cst = arith.constant 0.000000e+00 : f32
    %4 = vector.broadcast %cst : f32 to vector<64x16xf32>
    %5 = vector.extract_strided_slice %3 {offsets = [0, 0], sizes = [64, 32], strides = [1, 1]} : vector<80x32xbf16> to vector<64x32xbf16>
    %c0_4 = arith.constant 0 : index
    %c0_5 = arith.constant 0 : index
    %c0_6 = arith.constant 0 : index
    %6 = vector.load %arg3[%c0_4, %c0_5, %c0_6] : memref<4x32x16xbf16, #tpu.memory_space<vmem>>, vector<1x32x16xbf16>
    %7 = vector.shape_cast %6 : vector<1x32x16xbf16> to vector<32x16xbf16>
    %cst_7 = arith.constant dense<0.000000e+00> : vector<64x16xf32>
    %8 = tpu.matmul %5, %7, %cst_7 {dimension_numbers = #tpu.dot_dimension_numbers<[1], [0], [0], [1], [0, 0, 1, 1], [], []>} : vector<64x32xbf16>, vector<32x16xbf16>, vector<64x16xf32> -> vector<64x16xf32>
    %9 = arith.addf %4, %8 : vector<64x16xf32>
    %10 = vector.extract_strided_slice %3 {offsets = [1, 0], sizes = [64, 32], strides = [1, 1]} : vector<80x32xbf16> to vector<64x32xbf16>
    %c1 = arith.constant 1 : index
    %c0_8 = arith.constant 0 : index
    %c0_9 = arith.constant 0 : index
    %11 = vector.load %arg3[%c1, %c0_8, %c0_9] : memref<4x32x16xbf16, #tpu.memory_space<vmem>>, vector<1x32x16xbf16>
    %12 = vector.shape_cast %11 : vector<1x32x16xbf16> to vector<32x16xbf16>
    %cst_10 = arith.constant dense<0.000000e+00> : vector<64x16xf32>
    %13 = tpu.matmul %10, %12, %cst_10 {dimension_numbers = #tpu.dot_dimension_numbers<[1], [0], [0], [1], [0, 0, 1, 1], [], []>} : vector<64x32xbf16>, vector<32x16xbf16>, vector<64x16xf32> -> vector<64x16xf32>
    %14 = arith.addf %9, %13 : vector<64x16xf32>
    %15 = vector.extract_strided_slice %3 {offsets = [5, 0], sizes = [64, 32], strides = [1, 1]} : vector<80x32xbf16> to vector<64x32xbf16>
    %c2 = arith.constant 2 : index
    %c0_11 = arith.constant 0 : index
    %c0_12 = arith.constant 0 : index
    %16 = vector.load %arg3[%c2, %c0_11, %c0_12] : memref<4x32x16xbf16, #tpu.memory_space<vmem>>, vector<1x32x16xbf16>
    %17 = vector.shape_cast %16 : vector<1x32x16xbf16> to vector<32x16xbf16>
    %cst_13 = arith.constant dense<0.000000e+00> : vector<64x16xf32>
    %18 = tpu.matmul %15, %17, %cst_13 {dimension_numbers = #tpu.dot_dimension_numbers<[1], [0], [0], [1], [0, 0, 1, 1], [], []>} : vector<64x32xbf16>, vector<32x16xbf16>, vector<64x16xf32> -> vector<64x16xf32>
    %19 = arith.addf %14, %18 : vector<64x16xf32>
    %20 = vector.extract_strided_slice %3 {offsets = [6, 0], sizes = [64, 32], strides = [1, 1]} : vector<80x32xbf16> to vector<64x32xbf16>
    %c3 = arith.constant 3 : index
    %c0_14 = arith.constant 0 : index
    %c0_15 = arith.constant 0 : index
    %21 = vector.load %arg3[%c3, %c0_14, %c0_15] : memref<4x32x16xbf16, #tpu.memory_space<vmem>>, vector<1x32x16xbf16>
    %22 = vector.shape_cast %21 : vector<1x32x16xbf16> to vector<32x16xbf16>
    %cst_16 = arith.constant dense<0.000000e+00> : vector<64x16xf32>
    %23 = tpu.matmul %20, %22, %cst_16 {dimension_numbers = #tpu.dot_dimension_numbers<[1], [0], [0], [1], [0, 0, 1, 1], [], []>} : vector<64x32xbf16>, vector<32x16xbf16>, vector<64x16xf32> -> vector<64x16xf32>
    %24 = arith.addf %19, %23 : vector<64x16xf32>
    %c0_17 = arith.constant 0 : index
    %c0_18 = arith.constant 0 : index
    %25 = vector.load %arg4[%c0_17, %c0_18] : memref<1x16xf32, #tpu.memory_space<vmem>>, vector<1x16xf32>
    %26 = vector.broadcast %25 : vector<1x16xf32> to vector<64x16xf32>
    %27 = arith.addf %24, %26 : vector<64x16xf32>
    %cst_19 = arith.constant 0.000000e+00 : f32
    %28 = vector.broadcast %cst_19 : f32 to vector<64x16xf32>
    %29 = arith.maximumf %27, %28 : vector<64x16xf32>
    %30 = arith.truncf %29 : vector<64x16xf32> to vector<64x16xbf16>
    %c0_20 = arith.constant 0 : index
    %c0_21 = arith.constant 0 : index
    %31 = vector.load %arg5[%c0_20, %c0_21] : memref<64x16xbf16, #tpu.memory_space<vmem>>, vector<64x16xbf16>
    tpu.vector_store %arg5[%c0_20, %c0_21], %30 {strides = array<i32>} : memref<64x16xbf16, #tpu.memory_space<vmem>>, vector<64x16xbf16>,
    return
  }
  func.func @transform_0(%arg0: i32) -> (i32, i32) {
    %c0_i32 = arith.constant 0 : i32
    %c0_i32_0 = arith.constant 0 : i32
    return %arg0, %c0_i32 : i32, i32
  }
  func.func @transform_1(%arg0: i32) -> (i32, i32, i32) {
    %c0_i32 = arith.constant 0 : i32
    %c0_i32_0 = arith.constant 0 : i32
    %c0_i32_1 = arith.constant 0 : i32
    return %arg0, %c0_i32, %c0_i32_0 : i32, i32, i32
  }
  func.func @transform_2(%arg0: i32) -> (i32, i32, i32) {
    %c0_i32 = arith.constant 0 : i32
    %c0_i32_0 = arith.constant 0 : i32
    %c0_i32_1 = arith.constant 0 : i32
    %c0_i32_2 = arith.constant 0 : i32
    return %c0_i32, %c0_i32_0, %c0_i32_1 : i32, i32, i32
  }
  func.func @transform_3(%arg0: i32) -> (i32, i32) {
    %c0_i32 = arith.constant 0 : i32
    %c0_i32_0 = arith.constant 0 : i32
    %c0_i32_1 = arith.constant 0 : i32
    return %c0_i32, %c0_i32_0 : i32, i32
  }
  func.func @transform_4(%arg0: i32) -> (i32, i32) {
    %c0_i32 = arith.constant 0 : i32
    %c0_i32_0 = arith.constant 0 : i32
    return %arg0, %c0_i32 : i32, i32
  }
}

module attributes {stable_mosaic.version = 11 : i64} {
  func.func @_s2d_conv_kernel(%arg0: i32, %arg1: memref<32x64xbf16, #tpu.memory_space<vmem>>, %arg2: memref<1x16x64xbf16, #tpu.memory_space<vmem>>, %arg3: memref<4x64x32xbf16, #tpu.memory_space<vmem>>, %arg4: memref<1x32xf32, #tpu.memory_space<vmem>>, %arg5: memref<32x32xbf16, #tpu.memory_space<vmem>>) attributes {dimension_semantics = [#tpu.dimension_semantics<parallel>], iteration_bounds = array<i64: 1>, scalar_prefetch = 0 : i64, scratch_operands = 0 : i64, tpu.core_type = #tpu.core_type<tc>, window_params = [{transform_indices = @transform_0, window_bounds = array<i64: 32, 64>}, {transform_indices = @transform_1, window_bounds = array<i64: 1, 16, 64>}, {pipeline_mode = #tpu.pipeline_mode<synchronous>, transform_indices = @transform_2, window_bounds = array<i64: 4, 64, 32>}, {pipeline_mode = #tpu.pipeline_mode<synchronous>, transform_indices = @transform_3, window_bounds = array<i64: 1, 32>}, {transform_indices = @transform_4, window_bounds = array<i64: 32, 32>}]} {
    %c0 = arith.constant 0 : index
    %c0_0 = arith.constant 0 : index
    %0 = vector.load %arg1[%c0, %c0_0] : memref<32x64xbf16, #tpu.memory_space<vmem>>, vector<32x64xbf16>
    %c0_1 = arith.constant 0 : index
    %c0_2 = arith.constant 0 : index
    %c0_3 = arith.constant 0 : index
    %1 = vector.load %arg2[%c0_1, %c0_2, %c0_3] : memref<1x16x64xbf16, #tpu.memory_space<vmem>>, vector<1x16x64xbf16>
    %2 = vector.shape_cast %1 : vector<1x16x64xbf16> to vector<16x64xbf16>
    %3 = tpu.concatenate %0, %2 in 0 : vector<32x64xbf16>, vector<16x64xbf16> -> vector<48x64xbf16>
    %cst = arith.constant 0.000000e+00 : f32
    %4 = vector.broadcast %cst : f32 to vector<32x32xf32>
    %5 = vector.extract_strided_slice %3 {offsets = [0, 0], sizes = [32, 64], strides = [1, 1]} : vector<48x64xbf16> to vector<32x64xbf16>
    %c0_4 = arith.constant 0 : index
    %c0_5 = arith.constant 0 : index
    %c0_6 = arith.constant 0 : index
    %6 = vector.load %arg3[%c0_4, %c0_5, %c0_6] : memref<4x64x32xbf16, #tpu.memory_space<vmem>>, vector<1x64x32xbf16>
    %7 = vector.shape_cast %6 : vector<1x64x32xbf16> to vector<64x32xbf16>
    %cst_7 = arith.constant dense<0.000000e+00> : vector<32x32xf32>
    %8 = tpu.matmul %5, %7, %cst_7 {dimension_numbers = #tpu.dot_dimension_numbers<[1], [0], [0], [1], [0, 0, 1, 1], [], []>} : vector<32x64xbf16>, vector<64x32xbf16>, vector<32x32xf32> -> vector<32x32xf32>
    %9 = arith.addf %4, %8 : vector<32x32xf32>
    %10 = vector.extract_strided_slice %3 {offsets = [1, 0], sizes = [32, 64], strides = [1, 1]} : vector<48x64xbf16> to vector<32x64xbf16>
    %c1 = arith.constant 1 : index
    %c0_8 = arith.constant 0 : index
    %c0_9 = arith.constant 0 : index
    %11 = vector.load %arg3[%c1, %c0_8, %c0_9] : memref<4x64x32xbf16, #tpu.memory_space<vmem>>, vector<1x64x32xbf16>
    %12 = vector.shape_cast %11 : vector<1x64x32xbf16> to vector<64x32xbf16>
    %cst_10 = arith.constant dense<0.000000e+00> : vector<32x32xf32>
    %13 = tpu.matmul %10, %12, %cst_10 {dimension_numbers = #tpu.dot_dimension_numbers<[1], [0], [0], [1], [0, 0, 1, 1], [], []>} : vector<32x64xbf16>, vector<64x32xbf16>, vector<32x32xf32> -> vector<32x32xf32>
    %14 = arith.addf %9, %13 : vector<32x32xf32>
    %15 = vector.extract_strided_slice %3 {offsets = [3, 0], sizes = [32, 64], strides = [1, 1]} : vector<48x64xbf16> to vector<32x64xbf16>
    %c2 = arith.constant 2 : index
    %c0_11 = arith.constant 0 : index
    %c0_12 = arith.constant 0 : index
    %16 = vector.load %arg3[%c2, %c0_11, %c0_12] : memref<4x64x32xbf16, #tpu.memory_space<vmem>>, vector<1x64x32xbf16>
    %17 = vector.shape_cast %16 : vector<1x64x32xbf16> to vector<64x32xbf16>
    %cst_13 = arith.constant dense<0.000000e+00> : vector<32x32xf32>
    %18 = tpu.matmul %15, %17, %cst_13 {dimension_numbers = #tpu.dot_dimension_numbers<[1], [0], [0], [1], [0, 0, 1, 1], [], []>} : vector<32x64xbf16>, vector<64x32xbf16>, vector<32x32xf32> -> vector<32x32xf32>
    %19 = arith.addf %14, %18 : vector<32x32xf32>
    %20 = vector.extract_strided_slice %3 {offsets = [4, 0], sizes = [32, 64], strides = [1, 1]} : vector<48x64xbf16> to vector<32x64xbf16>
    %c3 = arith.constant 3 : index
    %c0_14 = arith.constant 0 : index
    %c0_15 = arith.constant 0 : index
    %21 = vector.load %arg3[%c3, %c0_14, %c0_15] : memref<4x64x32xbf16, #tpu.memory_space<vmem>>, vector<1x64x32xbf16>
    %22 = vector.shape_cast %21 : vector<1x64x32xbf16> to vector<64x32xbf16>
    %cst_16 = arith.constant dense<0.000000e+00> : vector<32x32xf32>
    %23 = tpu.matmul %20, %22, %cst_16 {dimension_numbers = #tpu.dot_dimension_numbers<[1], [0], [0], [1], [0, 0, 1, 1], [], []>} : vector<32x64xbf16>, vector<64x32xbf16>, vector<32x32xf32> -> vector<32x32xf32>
    %24 = arith.addf %19, %23 : vector<32x32xf32>
    %c0_17 = arith.constant 0 : index
    %c0_18 = arith.constant 0 : index
    %25 = vector.load %arg4[%c0_17, %c0_18] : memref<1x32xf32, #tpu.memory_space<vmem>>, vector<1x32xf32>
    %26 = vector.broadcast %25 : vector<1x32xf32> to vector<32x32xf32>
    %27 = arith.addf %24, %26 : vector<32x32xf32>
    %cst_19 = arith.constant 0.000000e+00 : f32
    %28 = vector.broadcast %cst_19 : f32 to vector<32x32xf32>
    %29 = arith.maximumf %27, %28 : vector<32x32xf32>
    %30 = arith.truncf %29 : vector<32x32xf32> to vector<32x32xbf16>
    %c0_20 = arith.constant 0 : index
    %c0_21 = arith.constant 0 : index
    %31 = vector.load %arg5[%c0_20, %c0_21] : memref<32x32xbf16, #tpu.memory_space<vmem>>, vector<32x32xbf16>
    tpu.vector_store %arg5[%c0_20, %c0_21], %30 {strides = array<i32>} : memref<32x32xbf16, #tpu.memory_space<vmem>>, vector<32x32xbf16>,
    return
  }
  func.func @transform_0(%arg0: i32) -> (i32, i32) {
    %c0_i32 = arith.constant 0 : i32
    %c0_i32_0 = arith.constant 0 : i32
    return %arg0, %c0_i32 : i32, i32
  }
  func.func @transform_1(%arg0: i32) -> (i32, i32, i32) {
    %c0_i32 = arith.constant 0 : i32
    %c0_i32_0 = arith.constant 0 : i32
    %c0_i32_1 = arith.constant 0 : i32
    return %arg0, %c0_i32, %c0_i32_0 : i32, i32, i32
  }
  func.func @transform_2(%arg0: i32) -> (i32, i32, i32) {
    %c0_i32 = arith.constant 0 : i32
    %c0_i32_0 = arith.constant 0 : i32
    %c0_i32_1 = arith.constant 0 : i32
    %c0_i32_2 = arith.constant 0 : i32
    return %c0_i32, %c0_i32_0, %c0_i32_1 : i32, i32, i32
  }
  func.func @transform_3(%arg0: i32) -> (i32, i32) {
    %c0_i32 = arith.constant 0 : i32
    %c0_i32_0 = arith.constant 0 : i32
    %c0_i32_1 = arith.constant 0 : i32
    return %c0_i32, %c0_i32_0 : i32, i32
  }
  func.func @transform_4(%arg0: i32) -> (i32, i32) {
    %c0_i32 = arith.constant 0 : i32
    %c0_i32_0 = arith.constant 0 : i32
    return %arg0, %c0_i32 : i32, i32
  }
}

module attributes {stable_mosaic.version = 11 : i64} {
  func.func @_s2d_conv_kernel(%arg0: i32, %arg1: memref<16x128xbf16, #tpu.memory_space<vmem>>, %arg2: memref<1x16x128xbf16, #tpu.memory_space<vmem>>, %arg3: memref<4x128x64xbf16, #tpu.memory_space<vmem>>, %arg4: memref<1x64xf32, #tpu.memory_space<vmem>>, %arg5: memref<16x64xbf16, #tpu.memory_space<vmem>>) attributes {dimension_semantics = [#tpu.dimension_semantics<parallel>], iteration_bounds = array<i64: 1>, scalar_prefetch = 0 : i64, scratch_operands = 0 : i64, tpu.core_type = #tpu.core_type<tc>, window_params = [{transform_indices = @transform_0, window_bounds = array<i64: 16, 128>}, {transform_indices = @transform_1, window_bounds = array<i64: 1, 16, 128>}, {pipeline_mode = #tpu.pipeline_mode<synchronous>, transform_indices = @transform_2, window_bounds = array<i64: 4, 128, 64>}, {pipeline_mode = #tpu.pipeline_mode<synchronous>, transform_indices = @transform_3, window_bounds = array<i64: 1, 64>}, {transform_indices = @transform_4, window_bounds = array<i64: 16, 64>}]} {
    %c0 = arith.constant 0 : index
    %c0_0 = arith.constant 0 : index
    %0 = vector.load %arg1[%c0, %c0_0] : memref<16x128xbf16, #tpu.memory_space<vmem>>, vector<16x128xbf16>
    %c0_1 = arith.constant 0 : index
    %c0_2 = arith.constant 0 : index
    %c0_3 = arith.constant 0 : index
    %1 = vector.load %arg2[%c0_1, %c0_2, %c0_3] : memref<1x16x128xbf16, #tpu.memory_space<vmem>>, vector<1x16x128xbf16>
    %2 = vector.shape_cast %1 : vector<1x16x128xbf16> to vector<16x128xbf16>
    %3 = tpu.concatenate %0, %2 in 0 : vector<16x128xbf16>, vector<16x128xbf16> -> vector<32x128xbf16>
    %cst = arith.constant 0.000000e+00 : f32
    %4 = vector.broadcast %cst : f32 to vector<16x64xf32>
    %5 = vector.extract_strided_slice %3 {offsets = [0, 0], sizes = [16, 128], strides = [1, 1]} : vector<32x128xbf16> to vector<16x128xbf16>
    %c0_4 = arith.constant 0 : index
    %c0_5 = arith.constant 0 : index
    %c0_6 = arith.constant 0 : index
    %6 = vector.load %arg3[%c0_4, %c0_5, %c0_6] : memref<4x128x64xbf16, #tpu.memory_space<vmem>>, vector<1x128x64xbf16>
    %7 = vector.shape_cast %6 : vector<1x128x64xbf16> to vector<128x64xbf16>
    %cst_7 = arith.constant dense<0.000000e+00> : vector<16x64xf32>
    %8 = tpu.matmul %5, %7, %cst_7 {dimension_numbers = #tpu.dot_dimension_numbers<[1], [0], [0], [1], [0, 0, 1, 1], [], []>} : vector<16x128xbf16>, vector<128x64xbf16>, vector<16x64xf32> -> vector<16x64xf32>
    %9 = arith.addf %4, %8 : vector<16x64xf32>
    %10 = vector.extract_strided_slice %3 {offsets = [1, 0], sizes = [16, 128], strides = [1, 1]} : vector<32x128xbf16> to vector<16x128xbf16>
    %c1 = arith.constant 1 : index
    %c0_8 = arith.constant 0 : index
    %c0_9 = arith.constant 0 : index
    %11 = vector.load %arg3[%c1, %c0_8, %c0_9] : memref<4x128x64xbf16, #tpu.memory_space<vmem>>, vector<1x128x64xbf16>
    %12 = vector.shape_cast %11 : vector<1x128x64xbf16> to vector<128x64xbf16>
    %cst_10 = arith.constant dense<0.000000e+00> : vector<16x64xf32>
    %13 = tpu.matmul %10, %12, %cst_10 {dimension_numbers = #tpu.dot_dimension_numbers<[1], [0], [0], [1], [0, 0, 1, 1], [], []>} : vector<16x128xbf16>, vector<128x64xbf16>, vector<16x64xf32> -> vector<16x64xf32>
    %14 = arith.addf %9, %13 : vector<16x64xf32>
    %15 = vector.extract_strided_slice %3 {offsets = [2, 0], sizes = [16, 128], strides = [1, 1]} : vector<32x128xbf16> to vector<16x128xbf16>
    %c2 = arith.constant 2 : index
    %c0_11 = arith.constant 0 : index
    %c0_12 = arith.constant 0 : index
    %16 = vector.load %arg3[%c2, %c0_11, %c0_12] : memref<4x128x64xbf16, #tpu.memory_space<vmem>>, vector<1x128x64xbf16>
    %17 = vector.shape_cast %16 : vector<1x128x64xbf16> to vector<128x64xbf16>
    %cst_13 = arith.constant dense<0.000000e+00> : vector<16x64xf32>
    %18 = tpu.matmul %15, %17, %cst_13 {dimension_numbers = #tpu.dot_dimension_numbers<[1], [0], [0], [1], [0, 0, 1, 1], [], []>} : vector<16x128xbf16>, vector<128x64xbf16>, vector<16x64xf32> -> vector<16x64xf32>
    %19 = arith.addf %14, %18 : vector<16x64xf32>
    %20 = vector.extract_strided_slice %3 {offsets = [3, 0], sizes = [16, 128], strides = [1, 1]} : vector<32x128xbf16> to vector<16x128xbf16>
    %c3 = arith.constant 3 : index
    %c0_14 = arith.constant 0 : index
    %c0_15 = arith.constant 0 : index
    %21 = vector.load %arg3[%c3, %c0_14, %c0_15] : memref<4x128x64xbf16, #tpu.memory_space<vmem>>, vector<1x128x64xbf16>
    %22 = vector.shape_cast %21 : vector<1x128x64xbf16> to vector<128x64xbf16>
    %cst_16 = arith.constant dense<0.000000e+00> : vector<16x64xf32>
    %23 = tpu.matmul %20, %22, %cst_16 {dimension_numbers = #tpu.dot_dimension_numbers<[1], [0], [0], [1], [0, 0, 1, 1], [], []>} : vector<16x128xbf16>, vector<128x64xbf16>, vector<16x64xf32> -> vector<16x64xf32>
    %24 = arith.addf %19, %23 : vector<16x64xf32>
    %c0_17 = arith.constant 0 : index
    %c0_18 = arith.constant 0 : index
    %25 = vector.load %arg4[%c0_17, %c0_18] : memref<1x64xf32, #tpu.memory_space<vmem>>, vector<1x64xf32>
    %26 = vector.broadcast %25 : vector<1x64xf32> to vector<16x64xf32>
    %27 = arith.addf %24, %26 : vector<16x64xf32>
    %cst_19 = arith.constant 0.000000e+00 : f32
    %28 = vector.broadcast %cst_19 : f32 to vector<16x64xf32>
    %29 = arith.maximumf %27, %28 : vector<16x64xf32>
    %30 = arith.truncf %29 : vector<16x64xf32> to vector<16x64xbf16>
    %c0_20 = arith.constant 0 : index
    %c0_21 = arith.constant 0 : index
    %31 = vector.load %arg5[%c0_20, %c0_21] : memref<16x64xbf16, #tpu.memory_space<vmem>>, vector<16x64xbf16>
    tpu.vector_store %arg5[%c0_20, %c0_21], %30 {strides = array<i32>} : memref<16x64xbf16, #tpu.memory_space<vmem>>, vector<16x64xbf16>,
    return
  }
  func.func @transform_0(%arg0: i32) -> (i32, i32) {
    %c0_i32 = arith.constant 0 : i32
    %c0_i32_0 = arith.constant 0 : i32
    return %arg0, %c0_i32 : i32, i32
  }
  func.func @transform_1(%arg0: i32) -> (i32, i32, i32) {
    %c0_i32 = arith.constant 0 : i32
    %c0_i32_0 = arith.constant 0 : i32
    %c0_i32_1 = arith.constant 0 : i32
    return %arg0, %c0_i32, %c0_i32_0 : i32, i32, i32
  }
  func.func @transform_2(%arg0: i32) -> (i32, i32, i32) {
    %c0_i32 = arith.constant 0 : i32
    %c0_i32_0 = arith.constant 0 : i32
    %c0_i32_1 = arith.constant 0 : i32
    %c0_i32_2 = arith.constant 0 : i32
    return %c0_i32, %c0_i32_0, %c0_i32_1 : i32, i32, i32
  }
  func.func @transform_3(%arg0: i32) -> (i32, i32) {
    %c0_i32 = arith.constant 0 : i32
    %c0_i32_0 = arith.constant 0 : i32
    %c0_i32_1 = arith.constant 0 : i32
    return %c0_i32, %c0_i32_0 : i32, i32
  }
  func.func @transform_4(%arg0: i32) -> (i32, i32) {
    %c0_i32 = arith.constant 0 : i32
    %c0_i32_0 = arith.constant 0 : i32
    return %arg0, %c0_i32 : i32, i32
  }
}

</mosaic_0001>

<llo_original>
// kernel: _forward_impl.4
$region0: #{_forward_impl.4}
  #allocation0 [shape = 'u32[]', space=smem, size = 0x4, offset = 0x4, fixed_abs, tag = 'smem constant byte address 0x4 - core index']
  #allocation1 [shape = 'u32[144,128]{1,0:T(1,128)}', space=vmem, size = 0x12000, scoped, tag = 'internal scratch']
  %s0 = inlined_call_operand.vmem [shape: bf16[352,12], index: 0, kind: input, shape index: {}]
  %s1 = inlined_call_operand.vmem [shape: bf16[1,16,12], index: 1, kind: input, shape index: {}]
  %s2 = inlined_call_operand.vmem [shape: bf16[4,12,8], index: 2, kind: input, shape index: {}]
  %s3 = inlined_call_operand.vmem [shape: f32[1,8], index: 3, kind: input, shape index: {}]
  %s4 = inlined_call_operand.vmem [shape: bf16[176,8], index: 4, kind: output, shape index: {}]
  %s5 = sld [smem:[#allocation0]]
  $region26: #{_forward_impl.4} parent=0
    _
  %s7 = ssub.s32 1, %s5
  %s8 = scalar_select 0, %s7, %s5
  // Predicated region
  $region2: #{_forward_impl.4} parent=0 // pred_check
    _
  $region3: #{_forward_impl.4} parent=0 // pred_check_branch
    %10 = sbr.rel (0) target = $region5
  $region4: #{_forward_impl.4} parent=0 // pred_region
    _
  $region5: #{_forward_impl.4} parent=0 // pred_fallthru
    _
  // Predicated region
  $region6: #{_forward_impl.4} parent=0 // pred_check
    _
  $region7: #{_forward_impl.4} parent=0 // pred_check_branch
    %12 = sbr.rel (0) target = $region9
  $region8: #{_forward_impl.4} parent=0 // pred_region
    _
  $region9: #{_forward_impl.4} parent=0 // pred_fallthru
    _
  // Predicated region
  $region10: #{_forward_impl.4} parent=0 // pred_check
    _
  $region11: #{_forward_impl.4} parent=0 // pred_check_branch
    %14 = sbr.rel (0) target = $region13
  $region12: #{_forward_impl.4} parent=0 // pred_region
    _
  $region13: #{_forward_impl.4} parent=0 // pred_fallthru
    _
  // Predicated region
  $region14: #{_forward_impl.4} parent=0 // pred_check
    _
  $region15: #{_forward_impl.4} parent=0 // pred_check_branch
    %16 = sbr.rel (0) target = $region17
  $region16: #{_forward_impl.4} parent=0 // pred_region
    _
  $region17: #{_forward_impl.4} parent=0 // pred_fallthru
    _
  %v18 = vld [vmem:[%s0] sm:$0xf]
  %v19 = vld [vmem:[%s0 + $0x4] sm:$0xf]
  %v20 = vld [vmem:[%s0 + $0x8] sm:$0xf]
  %v21 = vld [vmem:[%s0 + $0xc] sm:$0xf]
  %v22 = vld [vmem:[%s0 + $0x10] sm:$0xf]
  %v23 = vld [vmem:[%s0 + $0x14] sm:$0xf]
  %v24 = vld [vmem:[%s0 + $0x18] sm:$0xf]
  %v25 = vld [vmem:[%s0 + $0x1c] sm:$0xf]
  %v26 = vld [vmem:[%s0 + $0x20] sm:$0xf]
  %v27 = vld [vmem:[%s0 + $0x24] sm:$0xf]
  %v28 = vld [vmem:[%s0 + $0x28] sm:$0xf]
  %v29 = vld [vmem:[%s0 + $0x2c] sm:$0xf]
  %v30 = vld [vmem:[%s0 + $0x30] sm:$0xf]
  %v31 = vld [vmem:[%s0 + $0x34] sm:$0xf]
  %v32 = vld [vmem:[%s0 + $0x38] sm:$0xf]
  %v33 = vld [vmem:[%s0 + $0x3c] sm:$0xf]
  %v34 = vld [vmem:[%s0 + $0x40] sm:$0xf]
  %v35 = vld [vmem:[%s0 + $0x44] sm:$0xf]
  %v36 = vld [vmem:[%s0 + $0x48] sm:$0xf]
  %v37 = vld [vmem:[%s0 + $0x4c] sm:$0xf]
  %v38 = vld [vmem:[%s0 + $0x50] sm:$0xf]
  %v39 = vld [vmem:[%s0 + $0x54] sm:$0xf]
  %v40 = vld [vmem:[%s1] sm:$0xf]
  %v41 = vld [vmem:[%s1 + $0x4] sm:$0xf]
  %v64 = vunpack.c.l.b16 %v18
  %v65 = vunpack.c.l.b16 %v19
  %v66 = vunpack.c.l.b16 %v20
  %v67 = vunpack.c.l.b16 %v21
  %v68 = vunpack.c.l.b16 %v22
  %v69 = vunpack.c.l.b16 %v23
  %v70 = vunpack.c.l.b16 %v24
  %v71 = vunpack.c.l.b16 %v25
  %v72 = vunpack.c.l.b16 %v26
  %v73 = vunpack.c.l.b16 %v27
  %v74 = vunpack.c.l.b16 %v28
  %v75 = vunpack.c.l.b16 %v29
  %v76 = vunpack.c.l.b16 %v30
  %v77 = vunpack.c.l.b16 %v31
  %v78 = vunpack.c.l.b16 %v32
  %v79 = vunpack.c.l.b16 %v33
  %v80 = vunpack.c.l.b16 %v34
  %v81 = vunpack.c.l.b16 %v35
  %v82 = vunpack.c.l.b16 %v36
  %v83 = vunpack.c.l.b16 %v37
  %v84 = vunpack.c.l.b16 %v38
  %v85 = vunpack.c.l.b16 %v39
  %v86 = vpack.c.b16 %v65, %v64
  %v87 = vpack.c.b16 %v67, %v66
  %v88 = vpack.c.b16 %v69, %v68
  %v89 = vpack.c.b16 %v71, %v70
  %v90 = vpack.c.b16 %v73, %v72
  %v91 = vpack.c.b16 %v75, %v74
  %v92 = vpack.c.b16 %v77, %v76
  %v93 = vpack.c.b16 %v79, %v78
  %v94 = vpack.c.b16 %v81, %v80
  %v95 = vpack.c.b16 %v83, %v82
  %v96 = vpack.c.b16 %v85, %v84
  %v99 = vunpack.c.l.b16 %v40
  %v100 = vunpack.c.l.b16 %v41
  %v101 = vpack.c.b16 %v100, %v99
  %v102 = vld [vmem:[%s2] sm:$0xf]
  %v103 = vld [vmem:[%s2 + $0x4] sm:$0x3]
  %s104 = scalar_lea.vmem %s2, 8
  %v105 = vld [vmem:[%s104] sm:$0xf]
  %v106 = vld [vmem:[%s104 + $0x4] sm:$0x3]
  %vm107 = vsmask.f32 7424
  %v109 = vshrl.u32 %v86, 16
  %v111 = vshll.u32 %v86, 16
  %v113 = vrot.slane %v111, 1
  %v114 = vor.u32 %v109, %v113
  %v116 = vshll.u32 %v87, 16
  %v118 = vrot.slane %v116, 1
  %v119 = vsel %vm107, %v114, %v118
  %v120 = vshrl.u32 %v87, 16
  %v122 = vor.u32 %v120, %v118
  %v124 = vshll.u32 %v88, 16
  %v126 = vrot.slane %v124, 1
  %v127 = vsel %vm107, %v122, %v126
  %v128 = vshrl.u32 %v88, 16
  %v130 = vor.u32 %v128, %v126
  %v132 = vshll.u32 %v89, 16
  %v134 = vrot.slane %v132, 1
  %v135 = vsel %vm107, %v130, %v134
  %v136 = vshrl.u32 %v89, 16
  %v138 = vor.u32 %v136, %v134
  %v140 = vshll.u32 %v90, 16
  %v142 = vrot.slane %v140, 1
  %v143 = vsel %vm107, %v138, %v142
  %v144 = vshrl.u32 %v90, 16
  %v146 = vor.u32 %v144, %v142
  %v148 = vshll.u32 %v91, 16
  %v150 = vrot.slane %v148, 1
  %v151 = vsel %vm107, %v146, %v150
  %v152 = vshrl.u32 %v91, 16
  %v154 = vor.u32 %v152, %v150
  %v156 = vshll.u32 %v92, 16
  %v158 = vrot.slane %v156, 1
  %v159 = vsel %vm107, %v154, %v158
  %v160 = vshrl.u32 %v92, 16
  %v162 = vor.u32 %v160, %v158
  %v164 = vshll.u32 %v93, 16
  %v166 = vrot.slane %v164, 1
  %v167 = vsel %vm107, %v162, %v166
  %v168 = vshrl.u32 %v93, 16
  %v170 = vor.u32 %v168, %v166
  %v172 = vshll.u32 %v94, 16
  %v174 = vrot.slane %v172, 1
  %v175 = vsel %vm107, %v170, %v174
  %v176 = vshrl.u32 %v94, 16
  %v178 = vor.u32 %v176, %v174
  %v180 = vshll.u32 %v95, 16
  %v182 = vrot.slane %v180, 1
  %v183 = vsel %vm107, %v178, %v182
  %v184 = vshrl.u32 %v95, 16
  %v186 = vor.u32 %v184, %v182
  %v188 = vshll.u32 %v96, 16
  %v190 = vrot.slane %v188, 1
  %v191 = vsel %vm107, %v186, %v190
  %v192 = vshrl.u32 %v96, 16
  %v194 = vor.u32 %v192, %v190
  %v196 = vshll.u32 %v101, 16
  %v198 = vrot.slane %v196, 1
  %v199 = vsel %vm107, %v194, %v198
  %v202 = vunpack.c.l.b16 %v105
  %v203 = vunpack.c.l.b16 %v106
  %v204 = vpack.c.b16 %v203, %v202
  %vm205 = vcmask 97280
  %v207 = vsel %vm205, %v119, 0
  %v210 = vsel %vm205, %v127, 0
  %v213 = vsel %vm205, %v135, 0
  %v216 = vsel %vm205, %v143, 0
  %v219 = vsel %vm205, %v151, 0
  %v222 = vsel %vm205, %v159, 0
  %v225 = vsel %vm205, %v167, 0
  %v228 = vsel %vm205, %v175, 0
  %v231 = vsel %vm205, %v183, 0
  %v234 = vsel %vm205, %v191, 0
  %v237 = vsel %vm205, %v199, 0
  %vm239 = vcmask 1045504
  %v241 = vsel %vm239, %v204, 0
  %243 = vmatprep.subr.bf16.mxu0 0
  %244 = vmatpush1.bf16.msra.mxu0 %v241
  %245 = vmatprep.subr.bf16.mxu0 0
  %246 = vmatpush1.bf16.msra.mxu0 0
  %247 = vmatprep.subr.bf16.mxu0 0
  %248 = vmatpush1.bf16.msra.mxu0 0
  %249 = vmatprep.subr.bf16.mxu0 0
  %250 = vmatpush1.bf16.msra.mxu0 0
  %251 = vmatprep.subr.bf16.mxu0 0
  %252 = vmatpush1.bf16.msra.mxu0 0
  %253 = vmatprep.subr.bf16.mxu0 0
  %254 = vmatpush1.bf16.msra.mxu0 0
  %255 = vmatprep.subr.bf16.mxu0 0
  %256 = vmatpush1.bf16.msra.mxu0 0
  %257 = vmatprep.subr.bf16.mxu0 0
  %258 = vmatpush1.bf16.msra.mxu0 0
  %259 = vmatprep.subr.bf16.mxu0 0
  %260 = vmatpush1.bf16.msra.mxu0 0
  %261 = vmatprep.subr.bf16.mxu0 0
  %262 = vmatpush1.bf16.msra.mxu0 0
  %263 = vmatprep.subr.bf16.mxu0 0
  %264 = vmatpush1.bf16.msra.mxu0 0
  %265 = vmatprep.subr.bf16.mxu0 0
  %266 = vmatpush1.bf16.msra.mxu0 0
  %267 = vmatprep.subr.bf16.mxu0 0
  %268 = vmatpush1.bf16.msra.mxu0 0
  %269 = vmatprep.subr.bf16.mxu0 0
  %270 = vmatpush1.bf16.msra.mxu0 0
  %271 = vmatprep.subr.bf16.mxu0 0
  %272 = vmatpush1.bf16.msra.mxu0 0
  %273 = vmatprep.subr.bf16.mxu0 0
  %274 = vmatpush1.bf16.msra.mxu0 0
  %275 = vmatprep.mubr.bf16.mxu0 0
  %276 = vmatmul.mubr.bf16.gmra.mrb[0].mxu0 %v207
  %v277 = vpop.f32.mrb[0].mxu0
  %v278 = vadd.f32 0.0, %v277
  %v279 = vpop.f32.mrb[0].mxu0
  %v280 = vpop.f32.mrb[0].mxu0
  %v281 = vadd.f32 0.0, %v280
  %v282 = vpop.f32.mrb[0].mxu0
  %283 = vmatprep.mubr.bf16.mxu0 0
  %284 = vmatmul.mubr.bf16.gmra.mrb[0].mxu0 %v210
  %v285 = vpop.f32.mrb[0].mxu0
  %v286 = vadd.f32 0.0, %v285
  %v287 = vpop.f32.mrb[0].mxu0
  %v288 = vpop.f32.mrb[0].mxu0
  %v289 = vadd.f32 0.0, %v288
  %v290 = vpop.f32.mrb[0].mxu0
  %291 = vmatprep.mubr.bf16.mxu0 0
  %292 = vmatmul.mubr.bf16.gmra.mrb[0].mxu0 %v213
  %v293 = vpop.f32.mrb[0].mxu0
  %v294 = vadd.f32 0.0, %v293
  %v295 = vpop.f32.mrb[0].mxu0
  %v296 = vpop.f32.mrb[0].mxu0
  %v297 = vadd.f32 0.0, %v296
  %v298 = vpop.f32.mrb[0].mxu0
  %299 = vmatprep.mubr.bf16.mxu0 0
  %300 = vmatmul.mubr.bf16.gmra.mrb[0].mxu0 %v216
  %v301 = vpop.f32.mrb[0].mxu0
  %v302 = vadd.f32 0.0, %v301
  %v303 = vpop.f32.mrb[0].mxu0
  %v304 = vpop.f32.mrb[0].mxu0
  %v305 = vadd.f32 0.0, %v304
  %v306 = vpop.f32.mrb[0].mxu0
  %307 = vmatprep.mubr.bf16.mxu0 0
  %308 = vmatmul.mubr.bf16.gmra.mrb[0].mxu0 %v219
  %v309 = vpop.f32.mrb[0].mxu0
  %v310 = vadd.f32 0.0, %v309
  %v311 = vpop.f32.mrb[0].mxu0
  %v312 = vpop.f32.mrb[0].mxu0
  %v313 = vadd.f32 0.0, %v312
  %v314 = vpop.f32.mrb[0].mxu0
  %315 = vmatprep.mubr.bf16.mxu0 0
  %316 = vmatmul.mubr.bf16.gmra.mrb[0].mxu0 %v222
  %v317 = vpop.f32.mrb[0].mxu0
  %v318 = vadd.f32 0.0, %v317
  %v319 = vpop.f32.mrb[0].mxu0
  %v320 = vpop.f32.mrb[0].mxu0
  %v321 = vadd.f32 0.0, %v320
  %v322 = vpop.f32.mrb[0].mxu0
  %323 = vmatprep.mubr.bf16.mxu0 0
  %324 = vmatmul.mubr.bf16.gmra.mrb[0].mxu0 %v225
  %v325 = vpop.f32.mrb[0].mxu0
  %v326 = vadd.f32 0.0, %v325
  %v327 = vpop.f32.mrb[0].mxu0
  %v328 = vpop.f32.mrb[0].mxu0
  %v329 = vadd.f32 0.0, %v328
  %v330 = vpop.f32.mrb[0].mxu0
  %331 = vmatprep.mubr.bf16.mxu0 0
  %332 = vmatmul.mubr.bf16.gmra.mrb[0].mxu0 %v228
  %v333 = vpop.f32.mrb[0].mxu0
  %v334 = vadd.f32 0.0, %v333
  %v335 = vpop.f32.mrb[0].mxu0
  %v336 = vpop.f32.mrb[0].mxu0
  %v337 = vadd.f32 0.0, %v336
  %v338 = vpop.f32.mrb[0].mxu0
  %339 = vmatprep.mubr.bf16.mxu0 0
  %340 = vmatmul.mubr.bf16.gmra.mrb[0].mxu0 %v231
  %v341 = vpop.f32.mrb[0].mxu0
  %v342 = vadd.f32 0.0, %v341
  %v343 = vpop.f32.mrb[0].mxu0
  %v344 = vpop.f32.mrb[0].mxu0
  %v345 = vadd.f32 0.0, %v344
  %v346 = vpop.f32.mrb[0].mxu0
  %347 = vmatprep.mubr.bf16.mxu0 0
  %348 = vmatmul.mubr.bf16.gmra.mrb[0].mxu0 %v234
  %v349 = vpop.f32.mrb[0].mxu0
  %v350 = vadd.f32 0.0, %v349
  %v351 = vpop.f32.mrb[0].mxu0
  %v352 = vpop.f32.mrb[0].mxu0
  %v353 = vadd.f32 0.0, %v352
  %v354 = vpop.f32.mrb[0].mxu0
  %355 = vmatprep.mubr.bf16.mxu0 0
  %356 = vmatmul.mubr.bf16.gmra.mrb[0].mxu0 %v237
  %v357 = vpop.f32.mrb[0].mxu0
  %v358 = vadd.f32 0.0, %v357
  %v359 = vpop.f32.mrb[0].mxu0
  %v360 = vpop.f32.mrb[0].mxu0
  %v361 = vadd.f32 0.0, %v360
  %v362 = vpop.f32.mrb[0].mxu0
  %363 = vdwg.mxu0
  %v366 = vunpack.c.l.b16 %v102
  %v367 = vunpack.c.l.b16 %v103
  %v368 = vpack.c.b16 %v367, %v366
  %v369 = vsel %vm205, %v86, 0
  %v371 = vsel %vm205, %v87, 0
  %v373 = vsel %vm205, %v88, 0
  %v375 = vsel %vm205, %v89, 0
  %v377 = vsel %vm205, %v90, 0
  %v379 = vsel %vm205, %v91, 0
  %v381 = vsel %vm205, %v92, 0
  %v383 = vsel %vm205, %v93, 0
  %v385 = vsel %vm205, %v94, 0
  %v387 = vsel %vm205, %v95, 0
  %v389 = vsel %vm205, %v96, 0
  %v392 = vsel %vm239, %v368, 0
  %394 = vmatprep.subr.bf16.mxu0 0
  %395 = vmatpush1.bf16.msra.mxu0 %v392
  %396 = vmatprep.subr.bf16.mxu0 0
  %397 = vmatpush1.bf16.msra.mxu0 0
  %398 = vmatprep.subr.bf16.mxu0 0
  %399 = vmatpush1.bf16.msra.mxu0 0
  %400 = vmatprep.subr.bf16.mxu0 0
  %401 = vmatpush1.bf16.msra.mxu0 0
  %402 = vmatprep.subr.bf16.mxu0 0
  %403 = vmatpush1.bf16.msra.mxu0 0
  %404 = vmatprep.subr.bf16.mxu0 0
  %405 = vmatpush1.bf16.msra.mxu0 0
  %406 = vmatprep.subr.bf16.mxu0 0
  %407 = vmatpush1.bf16.msra.mxu0 0
  %408 = vmatprep.subr.bf16.mxu0 0
  %409 = vmatpush1.bf16.msra.mxu0 0
  %410 = vmatprep.subr.bf16.mxu0 0
  %411 = vmatpush1.bf16.msra.mxu0 0
  %412 = vmatprep.subr.bf16.mxu0 0
  %413 = vmatpush1.bf16.msra.mxu0 0
  %414 = vmatprep.subr.bf16.mxu0 0
  %415 = vmatpush1.bf16.msra.mxu0 0
  %416 = vmatprep.subr.bf16.mxu0 0
  %417 = vmatpush1.bf16.msra.mxu0 0
  %418 = vmatprep.subr.bf16.mxu0 0
  %419 = vmatpush1.bf16.msra.mxu0 0
  %420 = vmatprep.subr.bf16.mxu0 0
  %421 = vmatpush1.bf16.msra.mxu0 0
  %422 = vmatprep.subr.bf16.mxu0 0
  %423 = vmatpush1.bf16.msra.mxu0 0
  %424 = vmatprep.subr.bf16.mxu0 0
  %425 = vmatpush1.bf16.msra.mxu0 0
  %426 = vmatprep.mubr.bf16.mxu0 0
  %427 = vmatmul.mubr.bf16.gmra.mrb[0].mxu0 %v369
  %v428 = vpop.f32.mrb[0].mxu0
  %v429 = vadd.f32 %v278, %v428
  %v430 = vpop.f32.mrb[0].mxu0
  %v431 = vpop.f32.mrb[0].mxu0
  %v432 = vadd.f32 %v281, %v431
  %v433 = vpop.f32.mrb[0].mxu0
  %434 = vmatprep.mubr.bf16.mxu0 0
  %435 = vmatmul.mubr.bf16.gmra.mrb[0].mxu0 %v371
  %v436 = vpop.f32.mrb[0].mxu0
  %v437 = vadd.f32 %v286, %v436
  %v438 = vpop.f32.mrb[0].mxu0
  %v439 = vpop.f32.mrb[0].mxu0
  %v440 = vadd.f32 %v289, %v439
  %v441 = vpop.f32.mrb[0].mxu0
  %442 = vmatprep.mubr.bf16.mxu0 0
  %443 = vmatmul.mubr.bf16.gmra.mrb[0].mxu0 %v373
  %v444 = vpop.f32.mrb[0].mxu0
  %v445 = vadd.f32 %v294, %v444
  %v446 = vpop.f32.mrb[0].mxu0
  %v447 = vpop.f32.mrb[0].mxu0
  %v448 = vadd.f32 %v297, %v447
  %v449 = vpop.f32.mrb[0].mxu0
  %450 = vmatprep.mubr.bf16.mxu0 0
  %451 = vmatmul.mubr.bf16.gmra.mrb[0].mxu0 %v375
  %v452 = vpop.f32.mrb[0].mxu0
  %v453 = vadd.f32 %v302, %v452
  %v454 = vpop.f32.mrb[0].mxu0
  %v455 = vpop.f32.mrb[0].mxu0
  %v456 = vadd.f32 %v305, %v455
  %v457 = vpop.f32.mrb[0].mxu0
  %458 = vmatprep.mubr.bf16.mxu0 0
  %459 = vmatmul.mubr.bf16.gmra.mrb[0].mxu0 %v377
  %v460 = vpop.f32.mrb[0].mxu0
  %v461 = vadd.f32 %v310, %v460
  %v462 = vpop.f32.mrb[0].mxu0
  %v463 = vpop.f32.mrb[0].mxu0
  %v464 = vadd.f32 %v313, %v463
  %v465 = vpop.f32.mrb[0].mxu0
  %466 = vmatprep.mubr.bf16.mxu0 0
  %467 = vmatmul.mubr.bf16.gmra.mrb[0].mxu0 %v379
  %v468 = vpop.f32.mrb[0].mxu0
  %v469 = vadd.f32 %v318, %v468
  %v470 = vpop.f32.mrb[0].mxu0
  %v471 = vpop.f32.mrb[0].mxu0
  %v472 = vadd.f32 %v321, %v471
  %v473 = vpop.f32.mrb[0].mxu0
  %474 = vmatprep.mubr.bf16.mxu0 0
  %475 = vmatmul.mubr.bf16.gmra.mrb[0].mxu0 %v381
  %v476 = vpop.f32.mrb[0].mxu0
  %v477 = vadd.f32 %v326, %v476
  %v478 = vpop.f32.mrb[0].mxu0
  %v479 = vpop.f32.mrb[0].mxu0
  %v480 = vadd.f32 %v329, %v479
  %v481 = vpop.f32.mrb[0].mxu0
  %482 = vmatprep.mubr.bf16.mxu0 0
  %483 = vmatmul.mubr.bf16.gmra.mrb[0].mxu0 %v383
  %v484 = vpop.f32.mrb[0].mxu0
  %v485 = vadd.f32 %v334, %v484
  %v486 = vpop.f32.mrb[0].mxu0
  %v487 = vpop.f32.mrb[0].mxu0
  %v488 = vadd.f32 %v337, %v487
  %v489 = vpop.f32.mrb[0].mxu0
  %490 = vmatprep.mubr.bf16.mxu0 0
  %491 = vmatmul.mubr.bf16.gmra.mrb[0].mxu0 %v385
  %v492 = vpop.f32.mrb[0].mxu0
  %v493 = vadd.f32 %v342, %v492
  %v494 = vpop.f32.mrb[0].mxu0
  %v495 = vpop.f32.mrb[0].mxu0
  %v496 = vadd.f32 %v345, %v495
  %v497 = vpop.f32.mrb[0].mxu0
  %498 = vmatprep.mubr.bf16.mxu0 0
  %499 = vmatmul.mubr.bf16.gmra.mrb[0].mxu0 %v387
  %v500 = vpop.f32.mrb[0].mxu0
  %v501 = vadd.f32 %v350, %v500
  %v502 = vpop.f32.mrb[0].mxu0
  %v503 = vpop.f32.mrb[0].mxu0
  %v504 = vadd.f32 %v353, %v503
  %v505 = vpop.f32.mrb[0].mxu0
  %506 = vmatprep.mubr.bf16.mxu0 0
  %507 = vmatmul.mubr.bf16.gmra.mrb[0].mxu0 %v389
  %v508 = vpop.f32.mrb[0].mxu0
  %v509 = vadd.f32 %v358, %v508
  %v510 = vpop.f32.mrb[0].mxu0
  %v511 = vpop.f32.mrb[0].mxu0
  %v512 = vadd.f32 %v361, %v511
  %v513 = vpop.f32.mrb[0].mxu0
  %514 = vdwg.mxu0
  %s515 = scalar_lea.vmem %s2, 16
  %v516 = vld [vmem:[%s515] sm:$0xf]
  %v517 = vld [vmem:[%s515 + $0x4] sm:$0x3]
  %vm518 = vsmask.f32 3328
  %v519 = vrot.slane %v109, 4
  %v520 = vrot.slane %v111, 5
  %v521 = vor.u32 %v519, %v520
  %v522 = vrot.slane %v120, 4
  %v523 = vrot.slane %v116, 5
  %v524 = vor.u32 %v522, %v523
  %v525 = vsel %vm518, %v521, %v524
  %v526 = vrot.slane %v128, 4
  %v527 = vrot.slane %v124, 5
  %v528 = vor.u32 %v526, %v527
  %v529 = vsel %vm518, %v524, %v528
  %v530 = vrot.slane %v136, 4
  %v531 = vrot.slane %v132, 5
  %v532 = vor.u32 %v530, %v531
  %v533 = vsel %vm518, %v528, %v532
  %v534 = vrot.slane %v144, 4
  %v535 = vrot.slane %v140, 5
  %v536 = vor.u32 %v534, %v535
  %v537 = vsel %vm518, %v532, %v536
  %v538 = vrot.slane %v152, 4
  %v539 = vrot.slane %v148, 5
  %v540 = vor.u32 %v538, %v539
  %v541 = vsel %vm518, %v536, %v540
  %v542 = vrot.slane %v160, 4
  %v543 = vrot.slane %v156, 5
  %v544 = vor.u32 %v542, %v543
  %v545 = vsel %vm518, %v540, %v544
  %v546 = vrot.slane %v168, 4
  %v547 = vrot.slane %v164, 5
  %v548 = vor.u32 %v546, %v547
  %v549 = vsel %vm518, %v544, %v548
  %v550 = vrot.slane %v176, 4
  %v551 = vrot.slane %v172, 5
  %v552 = vor.u32 %v550, %v551
  %v553 = vsel %vm518, %v548, %v552
  %v554 = vrot.slane %v184, 4
  %v555 = vrot.slane %v180, 5
  %v556 = vor.u32 %v554, %v555
  %v557 = vsel %vm518, %v552, %v556
  %v558 = vrot.slane %v192, 4
  %v559 = vrot.slane %v188, 5
  %v560 = vor.u32 %v558, %v559
  %v561 = vsel %vm518, %v556, %v560
  %v562 = vshrl.u32 %v101, 16
  %v564 = vrot.slane %v562, 4
  %v565 = vrot.slane %v196, 5
  %v566 = vor.u32 %v564, %v565
  %v567 = vsel %vm518, %v560, %v566
  %v570 = vunpack.c.l.b16 %v516
  %v571 = vunpack.c.l.b16 %v517
  %v572 = vpack.c.b16 %v571, %v570
  %v574 = vsel %vm205, %v525, 0
  %v577 = vsel %vm205, %v529, 0
  %v580 = vsel %vm205, %v533, 0
  %v583 = vsel %vm205, %v537, 0
  %v586 = vsel %vm205, %v541, 0
  %v589 = vsel %vm205, %v545, 0
  %v592 = vsel %vm205, %v549, 0
  %v595 = vsel %vm205, %v553, 0
  %v598 = vsel %vm205, %v557, 0
  %v601 = vsel %vm205, %v561, 0
  %v604 = vsel %vm205, %v567, 0
  %v607 = vsel %vm239, %v572, 0
  %609 = vmatprep.subr.bf16.mxu0 0
  %610 = vmatpush1.bf16.msra.mxu0 %v607
  %611 = vmatprep.subr.bf16.mxu0 0
  %612 = vmatpush1.bf16.msra.mxu0 0
  %613 = vmatprep.subr.bf16.mxu0 0
  %614 = vmatpush1.bf16.msra.mxu0 0
  %615 = vmatprep.subr.bf16.mxu0 0
  %616 = vmatpush1.bf16.msra.mxu0 0
  %617 = vmatprep.subr.bf16.mxu0 0
  %618 = vmatpush1.bf16.msra.mxu0 0
  %619 = vmatprep.subr.bf16.mxu0 0
  %620 = vmatpush1.bf16.msra.mxu0 0
  %621 = vmatprep.subr.bf16.mxu0 0
  %622 = vmatpush1.bf16.msra.mxu0 0
  %623 = vmatprep.subr.bf16.mxu0 0
  %624 = vmatpush1.bf16.msra.mxu0 0
  %625 = vmatprep.subr.bf16.mxu0 0
  %626 = vmatpush1.bf16.msra.mxu0 0
  %627 = vmatprep.subr.bf16.mxu0 0
  %628 = vmatpush1.bf16.msra.mxu0 0
  %629 = vmatprep.subr.bf16.mxu0 0
  %630 = vmatpush1.bf16.msra.mxu0 0
  %631 = vmatprep.subr.bf16.mxu0 0
  %632 = vmatpush1.bf16.msra.mxu0 0
  %633 = vmatprep.subr.bf16.mxu0 0
  %634 = vmatpush1.bf16.msra.mxu0 0
  %635 = vmatprep.subr.bf16.mxu0 0
  %636 = vmatpush1.bf16.msra.mxu0 0
  %637 = vmatprep.subr.bf16.mxu0 0
  %638 = vmatpush1.bf16.msra.mxu0 0
  %639 = vmatprep.subr.bf16.mxu0 0
  %640 = vmatpush1.bf16.msra.mxu0 0
  %641 = vmatprep.mubr.bf16.mxu0 0
  %642 = vmatmul.mubr.bf16.gmra.mrb[0].mxu0 %v574
  %v643 = vpop.f32.mrb[0].mxu0
  %v644 = vadd.f32 0.0, %v643
  %v645 = vpop.f32.mrb[0].mxu0
  %v646 = vpop.f32.mrb[0].mxu0
  %v647 = vadd.f32 0.0, %v646
  %v648 = vpop.f32.mrb[0].mxu0
  %649 = vmatprep.mubr.bf16.mxu0 0
  %650 = vmatmul.mubr.bf16.gmra.mrb[0].mxu0 %v577
  %v651 = vpop.f32.mrb[0].mxu0
  %v652 = vadd.f32 0.0, %v651
  %v653 = vpop.f32.mrb[0].mxu0
  %v654 = vpop.f32.mrb[0].mxu0
  %v655 = vadd.f32 0.0, %v654
  %v656 = vpop.f32.mrb[0].mxu0
  %657 = vmatprep.mubr.bf16.mxu0 0
  %658 = vmatmul.mubr.bf16.gmra.mrb[0].mxu0 %v580
  %v659 = vpop.f32.mrb[0].mxu0
  %v660 = vadd.f32 0.0, %v659
  %v661 = vpop.f32.mrb[0].mxu0
  %v662 = vpop.f32.mrb[0].mxu0
  %v663 = vadd.f32 0.0, %v662
  %v664 = vpop.f32.mrb[0].mxu0
  %665 = vmatprep.mubr.bf16.mxu0 0
  %666 = vmatmul.mubr.bf16.gmra.mrb[0].mxu0 %v583
  %v667 = vpop.f32.mrb[0].mxu0
  %v668 = vadd.f32 0.0, %v667
  %v669 = vpop.f32.mrb[0].mxu0
  %v670 = vpop.f32.mrb[0].mxu0
  %v671 = vadd.f32 0.0, %v670
  %v672 = vpop.f32.mrb[0].mxu0
  %673 = vmatprep.mubr.bf16.mxu0 0
  %674 = vmatmul.mubr.bf16.gmra.mrb[0].mxu0 %v586
  %v675 = vpop.f32.mrb[0].mxu0
  %v676 = vadd.f32 0.0, %v675
  %v677 = vpop.f32.mrb[0].mxu0
  %v678 = vpop.f32.mrb[0].mxu0
  %v679 = vadd.f32 0.0, %v678
  %v680 = vpop.f32.mrb[0].mxu0
  %681 = vmatprep.mubr.bf16.mxu0 0
  %682 = vmatmul.mubr.bf16.gmra.mrb[0].mxu0 %v589
  %v683 = vpop.f32.mrb[0].mxu0
  %v684 = vadd.f32 0.0, %v683
  %v685 = vpop.f32.mrb[0].mxu0
  %v686 = vpop.f32.mrb[0].mxu0
  %v687 = vadd.f32 0.0, %v686
  %v688 = vpop.f32.mrb[0].mxu0
  %689 = vmatprep.mubr.bf16.mxu0 0
  %690 = vmatmul.mubr.bf16.gmra.mrb[0].mxu0 %v592
  %v691 = vpop.f32.mrb[0].mxu0
  %v692 = vadd.f32 0.0, %v691
  %v693 = vpop.f32.mrb[0].mxu0
  %v694 = vpop.f32.mrb[0].mxu0
  %v695 = vadd.f32 0.0, %v694
  %v696 = vpop.f32.mrb[0].mxu0
  %697 = vmatprep.mubr.bf16.mxu0 0
  %698 = vmatmul.mubr.bf16.gmra.mrb[0].mxu0 %v595
  %v699 = vpop.f32.mrb[0].mxu0
  %v700 = vadd.f32 0.0, %v699
  %v701 = vpop.f32.mrb[0].mxu0
  %v702 = vpop.f32.mrb[0].mxu0
  %v703 = vadd.f32 0.0, %v702
  %v704 = vpop.f32.mrb[0].mxu0
  %705 = vmatprep.mubr.bf16.mxu0 0
  %706 = vmatmul.mubr.bf16.gmra.mrb[0].mxu0 %v598
  %v707 = vpop.f32.mrb[0].mxu0
  %v708 = vadd.f32 0.0, %v707
  %v709 = vpop.f32.mrb[0].mxu0
  %v710 = vpop.f32.mrb[0].mxu0
  %v711 = vadd.f32 0.0, %v710
  %v712 = vpop.f32.mrb[0].mxu0
  %713 = vmatprep.mubr.bf16.mxu0 0
  %714 = vmatmul.mubr.bf16.gmra.mrb[0].mxu0 %v601
  %v715 = vpop.f32.mrb[0].mxu0
  %v716 = vadd.f32 0.0, %v715
  %v717 = vpop.f32.mrb[0].mxu0
  %v718 = vpop.f32.mrb[0].mxu0
  %v719 = vadd.f32 0.0, %v718
  %v720 = vpop.f32.mrb[0].mxu0
  %721 = vmatprep.mubr.bf16.mxu0 0
  %722 = vmatmul.mubr.bf16.gmra.mrb[0].mxu0 %v604
  %v723 = vpop.f32.mrb[0].mxu0
  %v724 = vadd.f32 0.0, %v723
  %v725 = vpop.f32.mrb[0].mxu0
  %v726 = vpop.f32.mrb[0].mxu0
  %v727 = vadd.f32 0.0, %v726
  %v728 = vpop.f32.mrb[0].mxu0
  %729 = vdwg.mxu0
  %v730 = vadd.f32 %v429, %v644
  %v731 = vadd.f32 %v432, %v647
  %v732 = vadd.f32 %v437, %v652
  %v733 = vadd.f32 %v440, %v655
  %v734 = vadd.f32 %v445, %v660
  %v735 = vadd.f32 %v448, %v663
  %v736 = vadd.f32 %v453, %v668
  %v737 = vadd.f32 %v456, %v671
  %v738 = vadd.f32 %v461, %v676
  %v739 = vadd.f32 %v464, %v679
  %v740 = vadd.f32 %v469, %v684
  %v741 = vadd.f32 %v472, %v687
  %v742 = vadd.f32 %v477, %v692
  %v743 = vadd.f32 %v480, %v695
  %v744 = vadd.f32 %v485, %v700
  %v745 = vadd.f32 %v488, %v703
  %v746 = vadd.f32 %v493, %v708
  %v747 = vadd.f32 %v496, %v711
  %v748 = vadd.f32 %v501, %v716
  %v749 = vadd.f32 %v504, %v719
  %v750 = vadd.f32 %v509, %v724
  %v751 = vadd.f32 %v512, %v727
  %s752 = scalar_lea.vmem %s2, 24
  %v753 = vld [vmem:[%s752] sm:$0xf]
  %v754 = vld [vmem:[%s752 + $0x4] sm:$0x3]
  %vm755 = vcmask 1042432
  %v756 = vrot.slane %v86, 5
  %v757 = vrot.slane %v87, 5
  %v758 = vsel %vm755, %v756, %v757
  %v759 = vrot.slane %v88, 5
  %v760 = vsel %vm755, %v757, %v759
  %v761 = vrot.slane %v89, 5
  %v762 = vsel %vm755, %v759, %v761
  %v763 = vrot.slane %v90, 5
  %v764 = vsel %vm755, %v761, %v763
  %v765 = vrot.slane %v91, 5
  %v766 = vsel %vm755, %v763, %v765
  %v767 = vrot.slane %v92, 5
  %v768 = vsel %vm755, %v765, %v767
  %v769 = vrot.slane %v93, 5
  %v770 = vsel %vm755, %v767, %v769
  %v771 = vrot.slane %v94, 5
  %v772 = vsel %vm755, %v769, %v771
  %v773 = vrot.slane %v95, 5
  %v774 = vsel %vm755, %v771, %v773
  %v775 = vrot.slane %v96, 5
  %v776 = vsel %vm755, %v773, %v775
  %v777 = vrot.slane %v101, 5
  %v778 = vsel %vm755, %v775, %v777
  %v781 = vunpack.c.l.b16 %v753
  %v782 = vunpack.c.l.b16 %v754
  %v783 = vpack.c.b16 %v782, %v781
  %v785 = vsel %vm205, %v758, 0
  %v788 = vsel %vm205, %v760, 0
  %v791 = vsel %vm205, %v762, 0
  %v794 = vsel %vm205, %v764, 0
  %v797 = vsel %vm205, %v766, 0
  %v800 = vsel %vm205, %v768, 0
  %v803 = vsel %vm205, %v770, 0
  %v806 = vsel %vm205, %v772, 0
  %v809 = vsel %vm205, %v774, 0
  %v812 = vsel %vm205, %v776, 0
  %v815 = vsel %vm205, %v778, 0
  %v818 = vsel %vm239, %v783, 0
  %820 = vmatprep.subr.bf16.mxu0 0
  %821 = vmatpush1.bf16.msra.mxu0 %v818
  %822 = vmatprep.subr.bf16.mxu0 0
  %823 = vmatpush1.bf16.msra.mxu0 0
  %824 = vmatprep.subr.bf16.mxu0 0
  %825 = vmatpush1.bf16.msra.mxu0 0
  %826 = vmatprep.subr.bf16.mxu0 0
  %827 = vmatpush1.bf16.msra.mxu0 0
  %828 = vmatprep.subr.bf16.mxu0 0
  %829 = vmatpush1.bf16.msra.mxu0 0
  %830 = vmatprep.subr.bf16.mxu0 0
  %831 = vmatpush1.bf16.msra.mxu0 0
  %832 = vmatprep.subr.bf16.mxu0 0
  %833 = vmatpush1.bf16.msra.mxu0 0
  %834 = vmatprep.subr.bf16.mxu0 0
  %835 = vmatpush1.bf16.msra.mxu0 0
  %836 = vmatprep.subr.bf16.mxu0 0
  %837 = vmatpush1.bf16.msra.mxu0 0
  %838 = vmatprep.subr.bf16.mxu0 0
  %839 = vmatpush1.bf16.msra.mxu0 0
  %840 = vmatprep.subr.bf16.mxu0 0
  %841 = vmatpush1.bf16.msra.mxu0 0
  %842 = vmatprep.subr.bf16.mxu0 0
  %843 = vmatpush1.bf16.msra.mxu0 0
  %844 = vmatprep.subr.bf16.mxu0 0
  %845 = vmatpush1.bf16.msra.mxu0 0
  %846 = vmatprep.subr.bf16.mxu0 0
  %847 = vmatpush1.bf16.msra.mxu0 0
  %848 = vmatprep.subr.bf16.mxu0 0
  %849 = vmatpush1.bf16.msra.mxu0 0
  %850 = vmatprep.subr.bf16.mxu0 0
  %851 = vmatpush1.bf16.msra.mxu0 0
  %852 = vmatprep.mubr.bf16.mxu0 0
  %853 = vmatmul.mubr.bf16.gmra.mrb[0].mxu0 %v785
  %v854 = vpop.f32.mrb[0].mxu0
  %v855 = vadd.f32 0.0, %v854
  %v856 = vpop.f32.mrb[0].mxu0
  %v857 = vpop.f32.mrb[0].mxu0
  %v858 = vadd.f32 0.0, %v857
  %v859 = vpop.f32.mrb[0].mxu0
  %860 = vmatprep.mubr.bf16.mxu0 0
  %861 = vmatmul.mubr.bf16.gmra.mrb[0].mxu0 %v788
  %v862 = vpop.f32.mrb[0].mxu0
  %v863 = vadd.f32 0.0, %v862
  %v864 = vpop.f32.mrb[0].mxu0
  %v865 = vpop.f32.mrb[0].mxu0
  %v866 = vadd.f32 0.0, %v865
  %v867 = vpop.f32.mrb[0].mxu0
  %868 = vmatprep.mubr.bf16.mxu0 0
  %869 = vmatmul.mubr.bf16.gmra.mrb[0].mxu0 %v791
  %v870 = vpop.f32.mrb[0].mxu0
  %v871 = vadd.f32 0.0, %v870
  %v872 = vpop.f32.mrb[0].mxu0
  %v873 = vpop.f32.mrb[0].mxu0
  %v874 = vadd.f32 0.0, %v873
  %v875 = vpop.f32.mrb[0].mxu0
  %876 = vmatprep.mubr.bf16.mxu0 0
  %877 = vmatmul.mubr.bf16.gmra.mrb[0].mxu0 %v794
  %v878 = vpop.f32.mrb[0].mxu0
  %v879 = vadd.f32 0.0, %v878
  %v880 = vpop.f32.mrb[0].mxu0
  %v881 = vpop.f32.mrb[0].mxu0
  %v882 = vadd.f32 0.0, %v881
  %v883 = vpop.f32.mrb[0].mxu0
  %884 = vmatprep.mubr.bf16.mxu0 0
  %885 = vmatmul.mubr.bf16.gmra.mrb[0].mxu0 %v797
  %v886 = vpop.f32.mrb[0].mxu0
  %v887 = vadd.f32 0.0, %v886
  %v888 = vpop.f32.mrb[0].mxu0
  %v889 = vpop.f32.mrb[0].mxu0
  %v890 = vadd.f32 0.0, %v889
  %v891 = vpop.f32.mrb[0].mxu0
  %892 = vmatprep.mubr.bf16.mxu0 0
  %893 = vmatmul.mubr.bf16.gmra.mrb[0].mxu0 %v800
  %v894 = vpop.f32.mrb[0].mxu0
  %v895 = vadd.f32 0.0, %v894
  %v896 = vpop.f32.mrb[0].mxu0
  %v897 = vpop.f32.mrb[0].mxu0
  %v898 = vadd.f32 0.0, %v897
  %v899 = vpop.f32.mrb[0].mxu0
  %900 = vmatprep.mubr.bf16.mxu0 0
  %901 = vmatmul.mubr.bf16.gmra.mrb[0].mxu0 %v803
  %v902 = vpop.f32.mrb[0].mxu0
  %v903 = vadd.f32 0.0, %v902
  %v904 = vpop.f32.mrb[0].mxu0
  %v905 = vpop.f32.mrb[0].mxu0
  %v906 = vadd.f32 0.0, %v905
  %v907 = vpop.f32.mrb[0].mxu0
  %908 = vmatprep.mubr.bf16.mxu0 0
  %909 = vmatmul.mubr.bf16.gmra.mrb[0].mxu0 %v806
  %v910 = vpop.f32.mrb[0].mxu0
  %v911 = vadd.f32 0.0, %v910
  %v912 = vpop.f32.mrb[0].mxu0
  %v913 = vpop.f32.mrb[0].mxu0
  %v914 = vadd.f32 0.0, %v913
  %v915 = vpop.f32.mrb[0].mxu0
  %916 = vmatprep.mubr.bf16.mxu0 0
  %917 = vmatmul.mubr.bf16.gmra.mrb[0].mxu0 %v809
  %v918 = vpop.f32.mrb[0].mxu0
  %v919 = vadd.f32 0.0, %v918
  %v920 = vpop.f32.mrb[0].mxu0
  %v921 = vpop.f32.mrb[0].mxu0
  %v922 = vadd.f32 0.0, %v921
  %v923 = vpop.f32.mrb[0].mxu0
  %924 = vmatprep.mubr.bf16.mxu0 0
  %925 = vmatmul.mubr.bf16.gmra.mrb[0].mxu0 %v812
  %v926 = vpop.f32.mrb[0].mxu0
  %v927 = vadd.f32 0.0, %v926
  %v928 = vpop.f32.mrb[0].mxu0
  %v929 = vpop.f32.mrb[0].mxu0
  %v930 = vadd.f32 0.0, %v929
  %v931 = vpop.f32.mrb[0].mxu0
  %932 = vmatprep.mubr.bf16.mxu0 0
  %933 = vmatmul.mubr.bf16.gmra.mrb[0].mxu0 %v815
  %v934 = vpop.f32.mrb[0].mxu0
  %v935 = vadd.f32 0.0, %v934
  %v936 = vpop.f32.mrb[0].mxu0
  %v937 = vpop.f32.mrb[0].mxu0
  %v938 = vadd.f32 0.0, %v937
  %v939 = vpop.f32.mrb[0].mxu0
  %940 = vdwg.mxu0
  %v941 = vadd.f32 %v730, %v855
  %v942 = vadd.f32 %v731, %v858
  %v943 = vadd.f32 %v732, %v863
  %v944 = vadd.f32 %v733, %v866
  %v945 = vadd.f32 %v734, %v871
  %v946 = vadd.f32 %v735, %v874
  %v947 = vadd.f32 %v736, %v879
  %v948 = vadd.f32 %v737, %v882
  %v949 = vadd.f32 %v738, %v887
  %v950 = vadd.f32 %v739, %v890
  %v951 = vadd.f32 %v740, %v895
  %v952 = vadd.f32 %v741, %v898
  %v953 = vadd.f32 %v742, %v903
  %v954 = vadd.f32 %v743, %v906
  %v955 = vadd.f32 %v744, %v911
  %v956 = vadd.f32 %v745, %v914
  %v957 = vadd.f32 %v746, %v919
  %v958 = vadd.f32 %v747, %v922
  %v959 = vadd.f32 %v748, %v927
  %v960 = vadd.f32 %v749, %v930
  %v961 = vadd.f32 %v750, %v935
  %v962 = vadd.f32 %v751, %v938
  %v963 = vld [vmem:[%s3] sm:$0x1]
  %v965 = vlaneseq
  %v966 = vshrl.u32 %v965, 7
  %v967 = vsub.s32 0, %v966
  %v968 = vrot.slane %v963, %v967
  %v970 = vadd.f32 %v941, %v968
  %v971 = vadd.f32 %v942, %v968
  %v972 = vadd.f32 %v943, %v968
  %v973 = vadd.f32 %v944, %v968
  %v974 = vadd.f32 %v945, %v968
  %v975 = vadd.f32 %v946, %v968
  %v976 = vadd.f32 %v947, %v968
  %v977 = vadd.f32 %v948, %v968
  %v978 = vadd.f32 %v949, %v968
  %v979 = vadd.f32 %v950, %v968
  %v980 = vadd.f32 %v951, %v968
  %v981 = vadd.f32 %v952, %v968
  %v982 = vadd.f32 %v953, %v968
  %v983 = vadd.f32 %v954, %v968
  %v984 = vadd.f32 %v955, %v968
  %v985 = vadd.f32 %v956, %v968
  %v986 = vadd.f32 %v957, %v968
  %v987 = vadd.f32 %v958, %v968
  %v988 = vadd.f32 %v959, %v968
  %v989 = vadd.f32 %v960, %v968
  %v990 = vadd.f32 %v961, %v968
  %v991 = vadd.f32 %v962, %v968
  %v992 = vmax.f32 %v970, 0.0
  %v993 = vmax.f32 %v971, 0.0
  %v994 = vmax.f32 %v972, 0.0
  %v995 = vmax.f32 %v973, 0.0
  %v996 = vmax.f32 %v974, 0.0
  %v997 = vmax.f32 %v975, 0.0
  %v998 = vmax.f32 %v976, 0.0
  %v999 = vmax.f32 %v977, 0.0
  %v1000 = vmax.f32 %v978, 0.0
  %v1001 = vmax.f32 %v979, 0.0
  %v1002 = vmax.f32 %v980, 0.0
  %v1003 = vmax.f32 %v981, 0.0
  %v1004 = vmax.f32 %v982, 0.0
  %v1005 = vmax.f32 %v983, 0.0
  %v1006 = vmax.f32 %v984, 0.0
  %v1007 = vmax.f32 %v985, 0.0
  %v1008 = vmax.f32 %v986, 0.0
  %v1009 = vmax.f32 %v987, 0.0
  %v1010 = vmax.f32 %v988, 0.0
  %v1011 = vmax.f32 %v989, 0.0
  %v1012 = vmax.f32 %v990, 0.0
  %v1013 = vmax.f32 %v991, 0.0
  %v1014 = vpack.c.bf16 %v993, %v992
  %v1015 = vpack.c.bf16 %v995, %v994
  %v1016 = vpack.c.bf16 %v997, %v996
  %v1017 = vpack.c.bf16 %v999, %v998
  %v1018 = vpack.c.bf16 %v1001, %v1000
  %v1019 = vpack.c.bf16 %v1003, %v1002
  %v1020 = vpack.c.bf16 %v1005, %v1004
  %v1021 = vpack.c.bf16 %v1007, %v1006
  %v1022 = vpack.c.bf16 %v1009, %v1008
  %v1023 = vpack.c.bf16 %v1011, %v1010
  %v1024 = vpack.c.bf16 %v1013, %v1012
  %v1036 = vunpack.c.l.b16 %v1014
  %v1037 = vunpack.c.h.b16 %v1014
  %v1038 = vunpack.c.l.b16 %v1015
  %v1039 = vunpack.c.h.b16 %v1015
  %v1040 = vunpack.c.l.b16 %v1016
  %v1041 = vunpack.c.h.b16 %v1016
  %v1042 = vunpack.c.l.b16 %v1017
  %v1043 = vunpack.c.h.b16 %v1017
  %v1044 = vunpack.c.l.b16 %v1018
  %v1045 = vunpack.c.h.b16 %v1018
  %v1046 = vunpack.c.l.b16 %v1019
  %v1047 = vunpack.c.h.b16 %v1019
  %v1048 = vunpack.c.l.b16 %v1020
  %v1049 = vunpack.c.h.b16 %v1020
  %v1050 = vunpack.c.l.b16 %v1021
  %v1051 = vunpack.c.h.b16 %v1021
  %v1052 = vunpack.c.l.b16 %v1022
  %v1053 = vunpack.c.h.b16 %v1022
  %v1054 = vunpack.c.l.b16 %v1023
  %v1055 = vunpack.c.h.b16 %v1023
  %v1056 = vunpack.c.l.b16 %v1024
  %v1057 = vunpack.c.h.b16 %v1024
  %v1058 = vpack.c.b16 %v1036, %v1036
  %v1059 = vpack.c.b16 %v1037, %v1037
  %v1060 = vpack.c.b16 %v1038, %v1038
  %v1061 = vpack.c.b16 %v1039, %v1039
  %v1062 = vpack.c.b16 %v1040, %v1040
  %v1063 = vpack.c.b16 %v1041, %v1041
  %v1064 = vpack.c.b16 %v1042, %v1042
  %v1065 = vpack.c.b16 %v1043, %v1043
  %v1066 = vpack.c.b16 %v1044, %v1044
  %v1067 = vpack.c.b16 %v1045, %v1045
  %v1068 = vpack.c.b16 %v1046, %v1046
  %v1069 = vpack.c.b16 %v1047, %v1047
  %v1070 = vpack.c.b16 %v1048, %v1048
  %v1071 = vpack.c.b16 %v1049, %v1049
  %v1072 = vpack.c.b16 %v1050, %v1050
  %v1073 = vpack.c.b16 %v1051, %v1051
  %v1074 = vpack.c.b16 %v1052, %v1052
  %v1075 = vpack.c.b16 %v1053, %v1053
  %v1076 = vpack.c.b16 %v1054, %v1054
  %v1077 = vpack.c.b16 %v1055, %v1055
  %v1078 = vpack.c.b16 %v1056, %v1056
  %v1079 = vpack.c.b16 %v1057, %v1057
  %vm1102 = vcmask 60416
  %1103 = vst.msk [vmem:[%s4] sm:$0xf] %vm1102, %v1058
  %1104 = vst.msk [vmem:[%s4 + $0x4] sm:$0xf] %vm1102, %v1059
  %1105 = vst.msk [vmem:[%s4 + $0x8] sm:$0xf] %vm1102, %v1060
  %1106 = vst.msk [vmem:[%s4 + $0xc] sm:$0xf] %vm1102, %v1061
  %1107 = vst.msk [vmem:[%s4 + $0x10] sm:$0xf] %vm1102, %v1062
  %1108 = vst.msk [vmem:[%s4 + $0x14] sm:$0xf] %vm1102, %v1063
  %1109 = vst.msk [vmem:[%s4 + $0x18] sm:$0xf] %vm1102, %v1064
  %1110 = vst.msk [vmem:[%s4 + $0x1c] sm:$0xf] %vm1102, %v1065
  %1111 = vst.msk [vmem:[%s4 + $0x20] sm:$0xf] %vm1102, %v1066
  %1112 = vst.msk [vmem:[%s4 + $0x24] sm:$0xf] %vm1102, %v1067
  %1113 = vst.msk [vmem:[%s4 + $0x28] sm:$0xf] %vm1102, %v1068
  %1114 = vst.msk [vmem:[%s4 + $0x2c] sm:$0xf] %vm1102, %v1069
  %1115 = vst.msk [vmem:[%s4 + $0x30] sm:$0xf] %vm1102, %v1070
  %1116 = vst.msk [vmem:[%s4 + $0x34] sm:$0xf] %vm1102, %v1071
  %1117 = vst.msk [vmem:[%s4 + $0x38] sm:$0xf] %vm1102, %v1072
  %1118 = vst.msk [vmem:[%s4 + $0x3c] sm:$0xf] %vm1102, %v1073
  %1119 = vst.msk [vmem:[%s4 + $0x40] sm:$0xf] %vm1102, %v1074
  %1120 = vst.msk [vmem:[%s4 + $0x44] sm:$0xf] %vm1102, %v1075
  %1121 = vst.msk [vmem:[%s4 + $0x48] sm:$0xf] %vm1102, %v1076
  %1122 = vst.msk [vmem:[%s4 + $0x4c] sm:$0xf] %vm1102, %v1077
  %1123 = vst.msk [vmem:[%s4 + $0x50] sm:$0xf] %vm1102, %v1078
  %1124 = vst.msk [vmem:[%s4 + $0x54] sm:$0xf] %vm1102, %v1079
  // Predicated region
  $region18: #{_forward_impl.4} parent=0 // pred_check
    _
  $region19: #{_forward_impl.4} parent=0 // pred_check_branch
    %1126 = sbr.rel (0) target = $region21
  $region20: #{_forward_impl.4} parent=0 // pred_region
    _
  $region21: #{_forward_impl.4} parent=0 // pred_fallthru
    _
  // Predicated region
  $region22: #{_forward_impl.4} parent=0 // pred_check
    _
  $region23: #{_forward_impl.4} parent=0 // pred_check_branch
    %1128 = sbr.rel (0) target = $region25
  $region24: #{_forward_impl.4} parent=0 // pred_region
    _
  $region25: #{_forward_impl.4} parent=0 // pred_fallthru
    _

// kernel: _forward_impl.5
$region0: #{_forward_impl.5}
  #allocation0 [shape = 'u32[]', space=smem, size = 0x4, offset = 0x4, fixed_abs, tag = 'smem constant byte address 0x4 - core index']
  #allocation1 [shape = 'u32[144,128]{1,0:T(1,128)}', space=vmem, size = 0x12000, scoped, tag = 'internal scratch']
  %s0 = inlined_call_operand.vmem [shape: bf16[128,32], index: 0, kind: input, shape index: {}]
  %s1 = inlined_call_operand.vmem [shape: bf16[1,16,32], index: 1, kind: input, shape index: {}]
  %s2 = inlined_call_operand.vmem [shape: bf16[4,32,16], index: 2, kind: input, shape index: {}]
  %s3 = inlined_call_operand.vmem [shape: f32[1,16], index: 3, kind: input, shape index: {}]
  %s4 = inlined_call_operand.vmem [shape: bf16[64,16], index: 4, kind: output, shape index: {}]
  %s5 = sld [smem:[#allocation0]]
  $region26: #{_forward_impl.5} parent=0
    _
  %s7 = ssub.s32 1, %s5
  %s8 = scalar_select 0, %s7, %s5
  // Predicated region
  $region2: #{_forward_impl.5} parent=0 // pred_check
    _
  $region3: #{_forward_impl.5} parent=0 // pred_check_branch
    %10 = sbr.rel (0) target = $region5
  $region4: #{_forward_impl.5} parent=0 // pred_region
    _
  $region5: #{_forward_impl.5} parent=0 // pred_fallthru
    _
  // Predicated region
  $region6: #{_forward_impl.5} parent=0 // pred_check
    _
  $region7: #{_forward_impl.5} parent=0 // pred_check_branch
    %12 = sbr.rel (0) target = $region9
  $region8: #{_forward_impl.5} parent=0 // pred_region
    _
  $region9: #{_forward_impl.5} parent=0 // pred_fallthru
    _
  // Predicated region
  $region10: #{_forward_impl.5} parent=0 // pred_check
    _
  $region11: #{_forward_impl.5} parent=0 // pred_check_branch
    %14 = sbr.rel (0) target = $region13
  $region12: #{_forward_impl.5} parent=0 // pred_region
    _
  $region13: #{_forward_impl.5} parent=0 // pred_fallthru
    _
  // Predicated region
  $region14: #{_forward_impl.5} parent=0 // pred_check
    _
  $region15: #{_forward_impl.5} parent=0 // pred_check_branch
    %16 = sbr.rel (0) target = $region17
  $region16: #{_forward_impl.5} parent=0 // pred_region
    _
  $region17: #{_forward_impl.5} parent=0 // pred_fallthru
    _
  %v18 = vld [vmem:[%s0] sm:$0xf]
  %v19 = vld [vmem:[%s0 + $0x4] sm:$0xf]
  %v20 = vld [vmem:[%s0 + $0x8] sm:$0xf]
  %v21 = vld [vmem:[%s0 + $0xc] sm:$0xf]
  %v22 = vld [vmem:[%s0 + $0x10] sm:$0xf]
  %v23 = vld [vmem:[%s0 + $0x14] sm:$0xf]
  %v24 = vld [vmem:[%s0 + $0x18] sm:$0xf]
  %v25 = vld [vmem:[%s0 + $0x1c] sm:$0xf]
  %v26 = vld [vmem:[%s1] sm:$0xf]
  %v27 = vld [vmem:[%s1 + $0x4] sm:$0xf]
  %v36 = vunpack.c.l.b16 %v18
  %v37 = vunpack.c.l.b16 %v19
  %v38 = vunpack.c.l.b16 %v20
  %v39 = vunpack.c.l.b16 %v21
  %v40 = vunpack.c.l.b16 %v22
  %v41 = vunpack.c.l.b16 %v23
  %v42 = vunpack.c.l.b16 %v24
  %v43 = vunpack.c.l.b16 %v25
  %v44 = vpack.c.b16 %v37, %v36
  %v45 = vpack.c.b16 %v39, %v38
  %v46 = vpack.c.b16 %v41, %v40
  %v47 = vpack.c.b16 %v43, %v42
  %v50 = vunpack.c.l.b16 %v26
  %v51 = vunpack.c.l.b16 %v27
  %v52 = vpack.c.b16 %v51, %v50
  %v53 = vld [vmem:[%s2] sm:$0xf]
  %v54 = vld [vmem:[%s2 + $0x4] sm:$0xf]
  %v55 = vld [vmem:[%s2 + $0x8] sm:$0xf]
  %v56 = vld [vmem:[%s2 + $0xc] sm:$0xf]
  %s57 = scalar_lea.vmem %s2, 16
  %v58 = vld [vmem:[%s57] sm:$0xf]
  %v59 = vld [vmem:[%s57 + $0x4] sm:$0xf]
  %v60 = vld [vmem:[%s57 + $0x8] sm:$0xf]
  %v61 = vld [vmem:[%s57 + $0xc] sm:$0xf]
  %vm62 = vsmask.f32 7424
  %v64 = vshrl.u32 %v44, 16
  %v66 = vshll.u32 %v44, 16
  %v68 = vrot.slane %v66, 1
  %v69 = vor.u32 %v64, %v68
  %v71 = vshll.u32 %v45, 16
  %v73 = vrot.slane %v71, 1
  %v74 = vsel %vm62, %v69, %v73
  %v75 = vshrl.u32 %v45, 16
  %v77 = vor.u32 %v75, %v73
  %v79 = vshll.u32 %v46, 16
  %v81 = vrot.slane %v79, 1
  %v82 = vsel %vm62, %v77, %v81
  %v83 = vshrl.u32 %v46, 16
  %v85 = vor.u32 %v83, %v81
  %v87 = vshll.u32 %v47, 16
  %v89 = vrot.slane %v87, 1
  %v90 = vsel %vm62, %v85, %v89
  %v91 = vshrl.u32 %v47, 16
  %v93 = vor.u32 %v91, %v89
  %v95 = vshll.u32 %v52, 16
  %v97 = vrot.slane %v95, 1
  %v98 = vsel %vm62, %v93, %v97
  %v103 = vunpack.c.l.b16 %v58
  %v104 = vunpack.c.l.b16 %v59
  %v105 = vunpack.c.l.b16 %v60
  %v106 = vunpack.c.l.b16 %v61
  %v107 = vpack.c.b16 %v104, %v103
  %v108 = vpack.c.b16 %v106, %v105
  %vm111 = vcmask 261120
  %v113 = vsel %vm111, %v74, 0
  %v116 = vsel %vm111, %v82, 0
  %v119 = vsel %vm111, %v90, 0
  %v122 = vsel %vm111, %v98, 0
  %124 = vmatprep.subr.bf16.mxu0 0
  %125 = vmatpush1.bf16.msra.mxu0 %v107
  %126 = vmatprep.subr.bf16.mxu0 0
  %127 = vmatpush1.bf16.msra.mxu0 %v108
  %128 = vmatprep.subr.bf16.mxu0 0
  %129 = vmatpush1.bf16.msra.mxu0 0
  %130 = vmatprep.subr.bf16.mxu0 0
  %131 = vmatpush1.bf16.msra.mxu0 0
  %132 = vmatprep.subr.bf16.mxu0 0
  %133 = vmatpush1.bf16.msra.mxu0 0
  %134 = vmatprep.subr.bf16.mxu0 0
  %135 = vmatpush1.bf16.msra.mxu0 0
  %136 = vmatprep.subr.bf16.mxu0 0
  %137 = vmatpush1.bf16.msra.mxu0 0
  %138 = vmatprep.subr.bf16.mxu0 0
  %139 = vmatpush1.bf16.msra.mxu0 0
  %140 = vmatprep.subr.bf16.mxu0 0
  %141 = vmatpush1.bf16.msra.mxu0 0
  %142 = vmatprep.subr.bf16.mxu0 0
  %143 = vmatpush1.bf16.msra.mxu0 0
  %144 = vmatprep.subr.bf16.mxu0 0
  %145 = vmatpush1.bf16.msra.mxu0 0
  %146 = vmatprep.subr.bf16.mxu0 0
  %147 = vmatpush1.bf16.msra.mxu0 0
  %148 = vmatprep.subr.bf16.mxu0 0
  %149 = vmatpush1.bf16.msra.mxu0 0
  %150 = vmatprep.subr.bf16.mxu0 0
  %151 = vmatpush1.bf16.msra.mxu0 0
  %152 = vmatprep.subr.bf16.mxu0 0
  %153 = vmatpush1.bf16.msra.mxu0 0
  %154 = vmatprep.subr.bf16.mxu0 0
  %155 = vmatpush1.bf16.msra.mxu0 0
  %156 = vmatprep.mubr.bf16.mxu0 0
  %157 = vmatmul.mubr.bf16.gmra.mrb[0].mxu0 %v113
  %v158 = vpop.f32.mrb[0].mxu0
  %v159 = vadd.f32 0.0, %v158
  %v160 = vpop.f32.mrb[0].mxu0
  %v161 = vpop.f32.mrb[0].mxu0
  %v162 = vadd.f32 0.0, %v161
  %v163 = vpop.f32.mrb[0].mxu0
  %164 = vmatprep.mubr.bf16.mxu0 0
  %165 = vmatmul.mubr.bf16.gmra.mrb[0].mxu0 %v116
  %v166 = vpop.f32.mrb[0].mxu0
  %v167 = vadd.f32 0.0, %v166
  %v168 = vpop.f32.mrb[0].mxu0
  %v169 = vpop.f32.mrb[0].mxu0
  %v170 = vadd.f32 0.0, %v169
  %v171 = vpop.f32.mrb[0].mxu0
  %172 = vmatprep.mubr.bf16.mxu0 0
  %173 = vmatmul.mubr.bf16.gmra.mrb[0].mxu0 %v119
  %v174 = vpop.f32.mrb[0].mxu0
  %v175 = vadd.f32 0.0, %v174
  %v176 = vpop.f32.mrb[0].mxu0
  %v177 = vpop.f32.mrb[0].mxu0
  %v178 = vadd.f32 0.0, %v177
  %v179 = vpop.f32.mrb[0].mxu0
  %180 = vmatprep.mubr.bf16.mxu0 0
  %181 = vmatmul.mubr.bf16.gmra.mrb[0].mxu0 %v122
  %v182 = vpop.f32.mrb[0].mxu0
  %v183 = vadd.f32 0.0, %v182
  %v184 = vpop.f32.mrb[0].mxu0
  %v185 = vpop.f32.mrb[0].mxu0
  %v186 = vadd.f32 0.0, %v185
  %v187 = vpop.f32.mrb[0].mxu0
  %188 = vdwg.mxu0
  %v193 = vunpack.c.l.b16 %v53
  %v194 = vunpack.c.l.b16 %v54
  %v195 = vunpack.c.l.b16 %v55
  %v196 = vunpack.c.l.b16 %v56
  %v197 = vpack.c.b16 %v194, %v193
  %v198 = vpack.c.b16 %v196, %v195
  %v201 = vsel %vm111, %v44, 0
  %v203 = vsel %vm111, %v45, 0
  %v205 = vsel %vm111, %v46, 0
  %v207 = vsel %vm111, %v47, 0
  %209 = vmatprep.subr.bf16.mxu0 0
  %210 = vmatpush1.bf16.msra.mxu0 %v197
  %211 = vmatprep.subr.bf16.mxu0 0
  %212 = vmatpush1.bf16.msra.mxu0 %v198
  %213 = vmatprep.subr.bf16.mxu0 0
  %214 = vmatpush1.bf16.msra.mxu0 0
  %215 = vmatprep.subr.bf16.mxu0 0
  %216 = vmatpush1.bf16.msra.mxu0 0
  %217 = vmatprep.subr.bf16.mxu0 0
  %218 = vmatpush1.bf16.msra.mxu0 0
  %219 = vmatprep.subr.bf16.mxu0 0
  %220 = vmatpush1.bf16.msra.mxu0 0
  %221 = vmatprep.subr.bf16.mxu0 0
  %222 = vmatpush1.bf16.msra.mxu0 0
  %223 = vmatprep.subr.bf16.mxu0 0
  %224 = vmatpush1.bf16.msra.mxu0 0
  %225 = vmatprep.subr.bf16.mxu0 0
  %226 = vmatpush1.bf16.msra.mxu0 0
  %227 = vmatprep.subr.bf16.mxu0 0
  %228 = vmatpush1.bf16.msra.mxu0 0
  %229 = vmatprep.subr.bf16.mxu0 0
  %230 = vmatpush1.bf16.msra.mxu0 0
  %231 = vmatprep.subr.bf16.mxu0 0
  %232 = vmatpush1.bf16.msra.mxu0 0
  %233 = vmatprep.subr.bf16.mxu0 0
  %234 = vmatpush1.bf16.msra.mxu0 0
  %235 = vmatprep.subr.bf16.mxu0 0
  %236 = vmatpush1.bf16.msra.mxu0 0
  %237 = vmatprep.subr.bf16.mxu0 0
  %238 = vmatpush1.bf16.msra.mxu0 0
  %239 = vmatprep.subr.bf16.mxu0 0
  %240 = vmatpush1.bf16.msra.mxu0 0
  %241 = vmatprep.mubr.bf16.mxu0 0
  %242 = vmatmul.mubr.bf16.gmra.mrb[0].mxu0 %v201
  %v243 = vpop.f32.mrb[0].mxu0
  %v244 = vadd.f32 %v159, %v243
  %v245 = vpop.f32.mrb[0].mxu0
  %v246 = vpop.f32.mrb[0].mxu0
  %v247 = vadd.f32 %v162, %v246
  %v248 = vpop.f32.mrb[0].mxu0
  %249 = vmatprep.mubr.bf16.mxu0 0
  %250 = vmatmul.mubr.bf16.gmra.mrb[0].mxu0 %v203
  %v251 = vpop.f32.mrb[0].mxu0
  %v252 = vadd.f32 %v167, %v251
  %v253 = vpop.f32.mrb[0].mxu0
  %v254 = vpop.f32.mrb[0].mxu0
  %v255 = vadd.f32 %v170, %v254
  %v256 = vpop.f32.mrb[0].mxu0
  %257 = vmatprep.mubr.bf16.mxu0 0
  %258 = vmatmul.mubr.bf16.gmra.mrb[0].mxu0 %v205
  %v259 = vpop.f32.mrb[0].mxu0
  %v260 = vadd.f32 %v175, %v259
  %v261 = vpop.f32.mrb[0].mxu0
  %v262 = vpop.f32.mrb[0].mxu0
  %v263 = vadd.f32 %v178, %v262
  %v264 = vpop.f32.mrb[0].mxu0
  %265 = vmatprep.mubr.bf16.mxu0 0
  %266 = vmatmul.mubr.bf16.gmra.mrb[0].mxu0 %v207
  %v267 = vpop.f32.mrb[0].mxu0
  %v268 = vadd.f32 %v183, %v267
  %v269 = vpop.f32.mrb[0].mxu0
  %v270 = vpop.f32.mrb[0].mxu0
  %v271 = vadd.f32 %v186, %v270
  %v272 = vpop.f32.mrb[0].mxu0
  %273 = vdwg.mxu0
  %s274 = scalar_lea.vmem %s2, 32
  %v275 = vld [vmem:[%s274] sm:$0xf]
  %v276 = vld [vmem:[%s274 + $0x4] sm:$0xf]
  %v277 = vld [vmem:[%s274 + $0x8] sm:$0xf]
  %v278 = vld [vmem:[%s274 + $0xc] sm:$0xf]
  %vm279 = vsmask.f32 5376
  %v280 = vrot.slane %v64, 2
  %v281 = vrot.slane %v66, 3
  %v282 = vor.u32 %v280, %v281
  %v283 = vrot.slane %v75, 2
  %v284 = vrot.slane %v71, 3
  %v285 = vor.u32 %v283, %v284
  %v286 = vsel %vm279, %v282, %v285
  %v287 = vrot.slane %v83, 2
  %v288 = vrot.slane %v79, 3
  %v289 = vor.u32 %v287, %v288
  %v290 = vsel %vm279, %v285, %v289
  %v291 = vrot.slane %v91, 2
  %v292 = vrot.slane %v87, 3
  %v293 = vor.u32 %v291, %v292
  %v294 = vsel %vm279, %v289, %v293
  %v295 = vshrl.u32 %v52, 16
  %v297 = vrot.slane %v295, 2
  %v298 = vrot.slane %v95, 3
  %v299 = vor.u32 %v297, %v298
  %v300 = vsel %vm279, %v293, %v299
  %v305 = vunpack.c.l.b16 %v275
  %v306 = vunpack.c.l.b16 %v276
  %v307 = vunpack.c.l.b16 %v277
  %v308 = vunpack.c.l.b16 %v278
  %v309 = vpack.c.b16 %v306, %v305
  %v310 = vpack.c.b16 %v308, %v307
  %v314 = vsel %vm111, %v286, 0
  %v317 = vsel %vm111, %v290, 0
  %v320 = vsel %vm111, %v294, 0
  %v323 = vsel %vm111, %v300, 0
  %325 = vmatprep.subr.bf16.mxu0 0
  %326 = vmatpush1.bf16.msra.mxu0 %v309
  %327 = vmatprep.subr.bf16.mxu0 0
  %328 = vmatpush1.bf16.msra.mxu0 %v310
  %329 = vmatprep.subr.bf16.mxu0 0
  %330 = vmatpush1.bf16.msra.mxu0 0
  %331 = vmatprep.subr.bf16.mxu0 0
  %332 = vmatpush1.bf16.msra.mxu0 0
  %333 = vmatprep.subr.bf16.mxu0 0
  %334 = vmatpush1.bf16.msra.mxu0 0
  %335 = vmatprep.subr.bf16.mxu0 0
  %336 = vmatpush1.bf16.msra.mxu0 0
  %337 = vmatprep.subr.bf16.mxu0 0
  %338 = vmatpush1.bf16.msra.mxu0 0
  %339 = vmatprep.subr.bf16.mxu0 0
  %340 = vmatpush1.bf16.msra.mxu0 0
  %341 = vmatprep.subr.bf16.mxu0 0
  %342 = vmatpush1.bf16.msra.mxu0 0
  %343 = vmatprep.subr.bf16.mxu0 0
  %344 = vmatpush1.bf16.msra.mxu0 0
  %345 = vmatprep.subr.bf16.mxu0 0
  %346 = vmatpush1.bf16.msra.mxu0 0
  %347 = vmatprep.subr.bf16.mxu0 0
  %348 = vmatpush1.bf16.msra.mxu0 0
  %349 = vmatprep.subr.bf16.mxu0 0
  %350 = vmatpush1.bf16.msra.mxu0 0
  %351 = vmatprep.subr.bf16.mxu0 0
  %352 = vmatpush1.bf16.msra.mxu0 0
  %353 = vmatprep.subr.bf16.mxu0 0
  %354 = vmatpush1.bf16.msra.mxu0 0
  %355 = vmatprep.subr.bf16.mxu0 0
  %356 = vmatpush1.bf16.msra.mxu0 0
  %357 = vmatprep.mubr.bf16.mxu0 0
  %358 = vmatmul.mubr.bf16.gmra.mrb[0].mxu0 %v314
  %v359 = vpop.f32.mrb[0].mxu0
  %v360 = vadd.f32 0.0, %v359
  %v361 = vpop.f32.mrb[0].mxu0
  %v362 = vpop.f32.mrb[0].mxu0
  %v363 = vadd.f32 0.0, %v362
  %v364 = vpop.f32.mrb[0].mxu0
  %365 = vmatprep.mubr.bf16.mxu0 0
  %366 = vmatmul.mubr.bf16.gmra.mrb[0].mxu0 %v317
  %v367 = vpop.f32.mrb[0].mxu0
  %v368 = vadd.f32 0.0, %v367
  %v369 = vpop.f32.mrb[0].mxu0
  %v370 = vpop.f32.mrb[0].mxu0
  %v371 = vadd.f32 0.0, %v370
  %v372 = vpop.f32.mrb[0].mxu0
  %373 = vmatprep.mubr.bf16.mxu0 0
  %374 = vmatmul.mubr.bf16.gmra.mrb[0].mxu0 %v320
  %v375 = vpop.f32.mrb[0].mxu0
  %v376 = vadd.f32 0.0, %v375
  %v377 = vpop.f32.mrb[0].mxu0
  %v378 = vpop.f32.mrb[0].mxu0
  %v379 = vadd.f32 0.0, %v378
  %v380 = vpop.f32.mrb[0].mxu0
  %381 = vmatprep.mubr.bf16.mxu0 0
  %382 = vmatmul.mubr.bf16.gmra.mrb[0].mxu0 %v323
  %v383 = vpop.f32.mrb[0].mxu0
  %v384 = vadd.f32 0.0, %v383
  %v385 = vpop.f32.mrb[0].mxu0
  %v386 = vpop.f32.mrb[0].mxu0
  %v387 = vadd.f32 0.0, %v386
  %v388 = vpop.f32.mrb[0].mxu0
  %389 = vdwg.mxu0
  %v390 = vadd.f32 %v244, %v360
  %v391 = vadd.f32 %v247, %v363
  %v392 = vadd.f32 %v252, %v368
  %v393 = vadd.f32 %v255, %v371
  %v394 = vadd.f32 %v260, %v376
  %v395 = vadd.f32 %v263, %v379
  %v396 = vadd.f32 %v268, %v384
  %v397 = vadd.f32 %v271, %v387
  %s398 = scalar_lea.vmem %s2, 48
  %v399 = vld [vmem:[%s398] sm:$0xf]
  %v400 = vld [vmem:[%s398 + $0x4] sm:$0xf]
  %v401 = vld [vmem:[%s398 + $0x8] sm:$0xf]
  %v402 = vld [vmem:[%s398 + $0xc] sm:$0xf]
  %vm403 = vcmask 1044480
  %v404 = vrot.slane %v44, 3
  %v405 = vrot.slane %v45, 3
  %v406 = vsel %vm403, %v404, %v405
  %v407 = vrot.slane %v46, 3
  %v408 = vsel %vm403, %v405, %v407
  %v409 = vrot.slane %v47, 3
  %v410 = vsel %vm403, %v407, %v409
  %v411 = vrot.slane %v52, 3
  %v412 = vsel %vm403, %v409, %v411
  %v417 = vunpack.c.l.b16 %v399
  %v418 = vunpack.c.l.b16 %v400
  %v419 = vunpack.c.l.b16 %v401
  %v420 = vunpack.c.l.b16 %v402
  %v421 = vpack.c.b16 %v418, %v417
  %v422 = vpack.c.b16 %v420, %v419
  %v426 = vsel %vm111, %v406, 0
  %v429 = vsel %vm111, %v408, 0
  %v432 = vsel %vm111, %v410, 0
  %v435 = vsel %vm111, %v412, 0
  %437 = vmatprep.subr.bf16.mxu0 0
  %438 = vmatpush1.bf16.msra.mxu0 %v421
  %439 = vmatprep.subr.bf16.mxu0 0
  %440 = vmatpush1.bf16.msra.mxu0 %v422
  %441 = vmatprep.subr.bf16.mxu0 0
  %442 = vmatpush1.bf16.msra.mxu0 0
  %443 = vmatprep.subr.bf16.mxu0 0
  %444 = vmatpush1.bf16.msra.mxu0 0
  %445 = vmatprep.subr.bf16.mxu0 0
  %446 = vmatpush1.bf16.msra.mxu0 0
  %447 = vmatprep.subr.bf16.mxu0 0
  %448 = vmatpush1.bf16.msra.mxu0 0
  %449 = vmatprep.subr.bf16.mxu0 0
  %450 = vmatpush1.bf16.msra.mxu0 0
  %451 = vmatprep.subr.bf16.mxu0 0
  %452 = vmatpush1.bf16.msra.mxu0 0
  %453 = vmatprep.subr.bf16.mxu0 0
  %454 = vmatpush1.bf16.msra.mxu0 0
  %455 = vmatprep.subr.bf16.mxu0 0
  %456 = vmatpush1.bf16.msra.mxu0 0
  %457 = vmatprep.subr.bf16.mxu0 0
  %458 = vmatpush1.bf16.msra.mxu0 0
  %459 = vmatprep.subr.bf16.mxu0 0
  %460 = vmatpush1.bf16.msra.mxu0 0
  %461 = vmatprep.subr.bf16.mxu0 0
  %462 = vmatpush1.bf16.msra.mxu0 0
  %463 = vmatprep.subr.bf16.mxu0 0
  %464 = vmatpush1.bf16.msra.mxu0 0
  %465 = vmatprep.subr.bf16.mxu0 0
  %466 = vmatpush1.bf16.msra.mxu0 0
  %467 = vmatprep.subr.bf16.mxu0 0
  %468 = vmatpush1.bf16.msra.mxu0 0
  %469 = vmatprep.mubr.bf16.mxu0 0
  %470 = vmatmul.mubr.bf16.gmra.mrb[0].mxu0 %v426
  %v471 = vpop.f32.mrb[0].mxu0
  %v472 = vadd.f32 0.0, %v471
  %v473 = vpop.f32.mrb[0].mxu0
  %v474 = vpop.f32.mrb[0].mxu0
  %v475 = vadd.f32 0.0, %v474
  %v476 = vpop.f32.mrb[0].mxu0
  %477 = vmatprep.mubr.bf16.mxu0 0
  %478 = vmatmul.mubr.bf16.gmra.mrb[0].mxu0 %v429
  %v479 = vpop.f32.mrb[0].mxu0
  %v480 = vadd.f32 0.0, %v479
  %v481 = vpop.f32.mrb[0].mxu0
  %v482 = vpop.f32.mrb[0].mxu0
  %v483 = vadd.f32 0.0, %v482
  %v484 = vpop.f32.mrb[0].mxu0
  %485 = vmatprep.mubr.bf16.mxu0 0
  %486 = vmatmul.mubr.bf16.gmra.mrb[0].mxu0 %v432
  %v487 = vpop.f32.mrb[0].mxu0
  %v488 = vadd.f32 0.0, %v487
  %v489 = vpop.f32.mrb[0].mxu0
  %v490 = vpop.f32.mrb[0].mxu0
  %v491 = vadd.f32 0.0, %v490
  %v492 = vpop.f32.mrb[0].mxu0
  %493 = vmatprep.mubr.bf16.mxu0 0
  %494 = vmatmul.mubr.bf16.gmra.mrb[0].mxu0 %v435
  %v495 = vpop.f32.mrb[0].mxu0
  %v496 = vadd.f32 0.0, %v495
  %v497 = vpop.f32.mrb[0].mxu0
  %v498 = vpop.f32.mrb[0].mxu0
  %v499 = vadd.f32 0.0, %v498
  %v500 = vpop.f32.mrb[0].mxu0
  %501 = vdwg.mxu0
  %v502 = vadd.f32 %v390, %v472
  %v503 = vadd.f32 %v391, %v475
  %v504 = vadd.f32 %v392, %v480
  %v505 = vadd.f32 %v393, %v483
  %v506 = vadd.f32 %v394, %v488
  %v507 = vadd.f32 %v395, %v491
  %v508 = vadd.f32 %v396, %v496
  %v509 = vadd.f32 %v397, %v499
  %v510 = vld [vmem:[%s3] sm:$0x1]
  %v512 = vlaneseq
  %v513 = vshrl.u32 %v512, 7
  %v514 = vsub.s32 0, %v513
  %v515 = vrot.slane %v510, %v514
  %v517 = vadd.f32 %v502, %v515
  %v518 = vadd.f32 %v503, %v515
  %v519 = vadd.f32 %v504, %v515
  %v520 = vadd.f32 %v505, %v515
  %v521 = vadd.f32 %v506, %v515
  %v522 = vadd.f32 %v507, %v515
  %v523 = vadd.f32 %v508, %v515
  %v524 = vadd.f32 %v509, %v515
  %v525 = vmax.f32 %v517, 0.0
  %v526 = vmax.f32 %v518, 0.0
  %v527 = vmax.f32 %v519, 0.0
  %v528 = vmax.f32 %v520, 0.0
  %v529 = vmax.f32 %v521, 0.0
  %v530 = vmax.f32 %v522, 0.0
  %v531 = vmax.f32 %v523, 0.0
  %v532 = vmax.f32 %v524, 0.0
  %v533 = vpack.c.bf16 %v526, %v525
  %v534 = vpack.c.bf16 %v528, %v527
  %v535 = vpack.c.bf16 %v530, %v529
  %v536 = vpack.c.bf16 %v532, %v531
  %v541 = vunpack.c.l.b16 %v533
  %v542 = vunpack.c.h.b16 %v533
  %v543 = vunpack.c.l.b16 %v534
  %v544 = vunpack.c.h.b16 %v534
  %v545 = vunpack.c.l.b16 %v535
  %v546 = vunpack.c.h.b16 %v535
  %v547 = vunpack.c.l.b16 %v536
  %v548 = vunpack.c.h.b16 %v536
  %v549 = vpack.c.b16 %v541, %v541
  %v550 = vpack.c.b16 %v542, %v542
  %v551 = vpack.c.b16 %v543, %v543
  %v552 = vpack.c.b16 %v544, %v544
  %v553 = vpack.c.b16 %v545, %v545
  %v554 = vpack.c.b16 %v546, %v546
  %v555 = vpack.c.b16 %v547, %v547
  %v556 = vpack.c.b16 %v548, %v548
  %vm565 = vcmask 125952
  %566 = vst.msk [vmem:[%s4] sm:$0xf] %vm565, %v549
  %567 = vst.msk [vmem:[%s4 + $0x4] sm:$0xf] %vm565, %v550
  %568 = vst.msk [vmem:[%s4 + $0x8] sm:$0xf] %vm565, %v551
  %569 = vst.msk [vmem:[%s4 + $0xc] sm:$0xf] %vm565, %v552
  %570 = vst.msk [vmem:[%s4 + $0x10] sm:$0xf] %vm565, %v553
  %571 = vst.msk [vmem:[%s4 + $0x14] sm:$0xf] %vm565, %v554
  %572 = vst.msk [vmem:[%s4 + $0x18] sm:$0xf] %vm565, %v555
  %573 = vst.msk [vmem:[%s4 + $0x1c] sm:$0xf] %vm565, %v556
  // Predicated region
  $region18: #{_forward_impl.5} parent=0 // pred_check
    _
  $region19: #{_forward_impl.5} parent=0 // pred_check_branch
    %575 = sbr.rel (0) target = $region21
  $region20: #{_forward_impl.5} parent=0 // pred_region
    _
  $region21: #{_forward_impl.5} parent=0 // pred_fallthru
    _
  // Predicated region
  $region22: #{_forward_impl.5} parent=0 // pred_check
    _
  $region23: #{_forward_impl.5} parent=0 // pred_check_branch
    %577 = sbr.rel (0) target = $region25
  $region24: #{_forward_impl.5} parent=0 // pred_region
    _
  $region25: #{_forward_impl.5} parent=0 // pred_fallthru
    _

// kernel: _forward_impl.6
$region0: #{_forward_impl.6}
  #allocation0 [shape = 'u32[]', space=smem, size = 0x4, offset = 0x4, fixed_abs, tag = 'smem constant byte address 0x4 - core index']
  #allocation1 [shape = 'u32[144,128]{1,0:T(1,128)}', space=vmem, size = 0x12000, scoped, tag = 'internal scratch']
  %s0 = inlined_call_operand.vmem [shape: bf16[64,64], index: 0, kind: input, shape index: {}]
  %s1 = inlined_call_operand.vmem [shape: bf16[1,16,64], index: 1, kind: input, shape index: {}]
  %s2 = inlined_call_operand.vmem [shape: bf16[4,64,32], index: 2, kind: input, shape index: {}]
  %s3 = inlined_call_operand.vmem [shape: f32[1,32], index: 3, kind: input, shape index: {}]
  %s4 = inlined_call_operand.vmem [shape: bf16[32,32], index: 4, kind: output, shape index: {}]
  %s5 = sld [smem:[#allocation0]]
  $region26: #{_forward_impl.6} parent=0
    _
  %s7 = ssub.s32 1, %s5
  %s8 = scalar_select 0, %s7, %s5
  // Predicated region
  $region2: #{_forward_impl.6} parent=0 // pred_check
    _
  $region3: #{_forward_impl.6} parent=0 // pred_check_branch
    %10 = sbr.rel (0) target = $region5
  $region4: #{_forward_impl.6} parent=0 // pred_region
    _
  $region5: #{_forward_impl.6} parent=0 // pred_fallthru
    _
  // Predicated region
  $region6: #{_forward_impl.6} parent=0 // pred_check
    _
  $region7: #{_forward_impl.6} parent=0 // pred_check_branch
    %12 = sbr.rel (0) target = $region9
  $region8: #{_forward_impl.6} parent=0 // pred_region
    _
  $region9: #{_forward_impl.6} parent=0 // pred_fallthru
    _
  // Predicated region
  $region10: #{_forward_impl.6} parent=0 // pred_check
    _
  $region11: #{_forward_impl.6} parent=0 // pred_check_branch
    %14 = sbr.rel (0) target = $region13
  $region12: #{_forward_impl.6} parent=0 // pred_region
    _
  $region13: #{_forward_impl.6} parent=0 // pred_fallthru
    _
  // Predicated region
  $region14: #{_forward_impl.6} parent=0 // pred_check
    _
  $region15: #{_forward_impl.6} parent=0 // pred_check_branch
    %16 = sbr.rel (0) target = $region17
  $region16: #{_forward_impl.6} parent=0 // pred_region
    _
  $region17: #{_forward_impl.6} parent=0 // pred_fallthru
    _
  %v18 = vld [vmem:[%s0] sm:$0xf]
  %v19 = vld [vmem:[%s0 + $0x4] sm:$0xf]
  %v20 = vld [vmem:[%s0 + $0x8] sm:$0xf]
  %v21 = vld [vmem:[%s0 + $0xc] sm:$0xf]
  %v22 = vld [vmem:[%s1] sm:$0xf]
  %v23 = vld [vmem:[%s1 + $0x4] sm:$0xf]
  %v28 = vunpack.c.l.b16 %v18
  %v29 = vunpack.c.l.b16 %v19
  %v30 = vunpack.c.l.b16 %v20
  %v31 = vunpack.c.l.b16 %v21
  %v32 = vpack.c.b16 %v29, %v28
  %v33 = vpack.c.b16 %v31, %v30
  %v36 = vunpack.c.l.b16 %v22
  %v37 = vunpack.c.l.b16 %v23
  %v38 = vpack.c.b16 %v37, %v36
  %v39 = vld [vmem:[%s2] sm:$0xf]
  %v40 = vld [vmem:[%s2 + $0x4] sm:$0xf]
  %v41 = vld [vmem:[%s2 + $0x8] sm:$0xf]
  %v42 = vld [vmem:[%s2 + $0xc] sm:$0xf]
  %v43 = vld [vmem:[%s2 + $0x10] sm:$0xf]
  %v44 = vld [vmem:[%s2 + $0x14] sm:$0xf]
  %v45 = vld [vmem:[%s2 + $0x18] sm:$0xf]
  %v46 = vld [vmem:[%s2 + $0x1c] sm:$0xf]
  %s47 = scalar_lea.vmem %s2, 32
  %v48 = vld [vmem:[%s47] sm:$0xf]
  %v49 = vld [vmem:[%s47 + $0x4] sm:$0xf]
  %v50 = vld [vmem:[%s47 + $0x8] sm:$0xf]
  %v51 = vld [vmem:[%s47 + $0xc] sm:$0xf]
  %v52 = vld [vmem:[%s47 + $0x10] sm:$0xf]
  %v53 = vld [vmem:[%s47 + $0x14] sm:$0xf]
  %v54 = vld [vmem:[%s47 + $0x18] sm:$0xf]
  %v55 = vld [vmem:[%s47 + $0x1c] sm:$0xf]
  %vm56 = vsmask.f32 7424
  %v58 = vshrl.u32 %v32, 16
  %v60 = vshll.u32 %v32, 16
  %v62 = vrot.slane %v60, 1
  %v63 = vor.u32 %v58, %v62
  %v65 = vshll.u32 %v33, 16
  %v67 = vrot.slane %v65, 1
  %v68 = vsel %vm56, %v63, %v67
  %v69 = vshrl.u32 %v33, 16
  %v71 = vor.u32 %v69, %v67
  %v73 = vshll.u32 %v38, 16
  %v75 = vrot.slane %v73, 1
  %v76 = vsel %vm56, %v71, %v75
  %v85 = vunpack.c.l.b16 %v48
  %v86 = vunpack.c.l.b16 %v49
  %v87 = vunpack.c.l.b16 %v50
  %v88 = vunpack.c.l.b16 %v51
  %v89 = vunpack.c.l.b16 %v52
  %v90 = vunpack.c.l.b16 %v53
  %v91 = vunpack.c.l.b16 %v54
  %v92 = vunpack.c.l.b16 %v55
  %v93 = vpack.c.b16 %v86, %v85
  %v94 = vpack.c.b16 %v88, %v87
  %v95 = vpack.c.b16 %v90, %v89
  %v96 = vpack.c.b16 %v92, %v91
  %vm101 = vcmask 523264
  %v103 = vsel %vm101, %v68, 0
  %v106 = vsel %vm101, %v76, 0
  %108 = vmatprep.subr.bf16.mxu0 0
  %109 = vmatpush1.bf16.msra.mxu0 %v93
  %110 = vmatprep.subr.bf16.mxu0 0
  %111 = vmatpush1.bf16.msra.mxu0 %v94
  %112 = vmatprep.subr.bf16.mxu0 0
  %113 = vmatpush1.bf16.msra.mxu0 %v95
  %114 = vmatprep.subr.bf16.mxu0 0
  %115 = vmatpush1.bf16.msra.mxu0 %v96
  %116 = vmatprep.subr.bf16.mxu0 0
  %117 = vmatpush1.bf16.msra.mxu0 0
  %118 = vmatprep.subr.bf16.mxu0 0
  %119 = vmatpush1.bf16.msra.mxu0 0
  %120 = vmatprep.subr.bf16.mxu0 0
  %121 = vmatpush1.bf16.msra.mxu0 0
  %122 = vmatprep.subr.bf16.mxu0 0
  %123 = vmatpush1.bf16.msra.mxu0 0
  %124 = vmatprep.subr.bf16.mxu0 0
  %125 = vmatpush1.bf16.msra.mxu0 0
  %126 = vmatprep.subr.bf16.mxu0 0
  %127 = vmatpush1.bf16.msra.mxu0 0
  %128 = vmatprep.subr.bf16.mxu0 0
  %129 = vmatpush1.bf16.msra.mxu0 0
  %130 = vmatprep.subr.bf16.mxu0 0
  %131 = vmatpush1.bf16.msra.mxu0 0
  %132 = vmatprep.subr.bf16.mxu0 0
  %133 = vmatpush1.bf16.msra.mxu0 0
  %134 = vmatprep.subr.bf16.mxu0 0
  %135 = vmatpush1.bf16.msra.mxu0 0
  %136 = vmatprep.subr.bf16.mxu0 0
  %137 = vmatpush1.bf16.msra.mxu0 0
  %138 = vmatprep.subr.bf16.mxu0 0
  %139 = vmatpush1.bf16.msra.mxu0 0
  %140 = vmatprep.mubr.bf16.mxu0 0
  %141 = vmatmul.mubr.bf16.gmra.mrb[0].mxu0 %v103
  %v142 = vpop.f32.mrb[0].mxu0
  %v143 = vadd.f32 0.0, %v142
  %v144 = vpop.f32.mrb[0].mxu0
  %v145 = vpop.f32.mrb[0].mxu0
  %v146 = vadd.f32 0.0, %v145
  %v147 = vpop.f32.mrb[0].mxu0
  %148 = vmatprep.mubr.bf16.mxu0 0
  %149 = vmatmul.mubr.bf16.gmra.mrb[0].mxu0 %v106
  %v150 = vpop.f32.mrb[0].mxu0
  %v151 = vadd.f32 0.0, %v150
  %v152 = vpop.f32.mrb[0].mxu0
  %v153 = vpop.f32.mrb[0].mxu0
  %v154 = vadd.f32 0.0, %v153
  %v155 = vpop.f32.mrb[0].mxu0
  %156 = vdwg.mxu0
  %v165 = vunpack.c.l.b16 %v39
  %v166 = vunpack.c.l.b16 %v40
  %v167 = vunpack.c.l.b16 %v41
  %v168 = vunpack.c.l.b16 %v42
  %v169 = vunpack.c.l.b16 %v43
  %v170 = vunpack.c.l.b16 %v44
  %v171 = vunpack.c.l.b16 %v45
  %v172 = vunpack.c.l.b16 %v46
  %v173 = vpack.c.b16 %v166, %v165
  %v174 = vpack.c.b16 %v168, %v167
  %v175 = vpack.c.b16 %v170, %v169
  %v176 = vpack.c.b16 %v172, %v171
  %v181 = vsel %vm101, %v32, 0
  %v183 = vsel %vm101, %v33, 0
  %185 = vmatprep.subr.bf16.mxu0 0
  %186 = vmatpush1.bf16.msra.mxu0 %v173
  %187 = vmatprep.subr.bf16.mxu0 0
  %188 = vmatpush1.bf16.msra.mxu0 %v174
  %189 = vmatprep.subr.bf16.mxu0 0
  %190 = vmatpush1.bf16.msra.mxu0 %v175
  %191 = vmatprep.subr.bf16.mxu0 0
  %192 = vmatpush1.bf16.msra.mxu0 %v176
  %193 = vmatprep.subr.bf16.mxu0 0
  %194 = vmatpush1.bf16.msra.mxu0 0
  %195 = vmatprep.subr.bf16.mxu0 0
  %196 = vmatpush1.bf16.msra.mxu0 0
  %197 = vmatprep.subr.bf16.mxu0 0
  %198 = vmatpush1.bf16.msra.mxu0 0
  %199 = vmatprep.subr.bf16.mxu0 0
  %200 = vmatpush1.bf16.msra.mxu0 0
  %201 = vmatprep.subr.bf16.mxu0 0
  %202 = vmatpush1.bf16.msra.mxu0 0
  %203 = vmatprep.subr.bf16.mxu0 0
  %204 = vmatpush1.bf16.msra.mxu0 0
  %205 = vmatprep.subr.bf16.mxu0 0
  %206 = vmatpush1.bf16.msra.mxu0 0
  %207 = vmatprep.subr.bf16.mxu0 0
  %208 = vmatpush1.bf16.msra.mxu0 0
  %209 = vmatprep.subr.bf16.mxu0 0
  %210 = vmatpush1.bf16.msra.mxu0 0
  %211 = vmatprep.subr.bf16.mxu0 0
  %212 = vmatpush1.bf16.msra.mxu0 0
  %213 = vmatprep.subr.bf16.mxu0 0
  %214 = vmatpush1.bf16.msra.mxu0 0
  %215 = vmatprep.subr.bf16.mxu0 0
  %216 = vmatpush1.bf16.msra.mxu0 0
  %217 = vmatprep.mubr.bf16.mxu0 0
  %218 = vmatmul.mubr.bf16.gmra.mrb[0].mxu0 %v181
  %v219 = vpop.f32.mrb[0].mxu0
  %v220 = vadd.f32 %v143, %v219
  %v221 = vpop.f32.mrb[0].mxu0
  %v222 = vpop.f32.mrb[0].mxu0
  %v223 = vadd.f32 %v146, %v222
  %v224 = vpop.f32.mrb[0].mxu0
  %225 = vmatprep.mubr.bf16.mxu0 0
  %226 = vmatmul.mubr.bf16.gmra.mrb[0].mxu0 %v183
  %v227 = vpop.f32.mrb[0].mxu0
  %v228 = vadd.f32 %v151, %v227
  %v229 = vpop.f32.mrb[0].mxu0
  %v230 = vpop.f32.mrb[0].mxu0
  %v231 = vadd.f32 %v154, %v230
  %v232 = vpop.f32.mrb[0].mxu0
  %233 = vdwg.mxu0
  %s234 = scalar_lea.vmem %s2, 64
  %v235 = vld [vmem:[%s234] sm:$0xf]
  %v236 = vld [vmem:[%s234 + $0x4] sm:$0xf]
  %v237 = vld [vmem:[%s234 + $0x8] sm:$0xf]
  %v238 = vld [vmem:[%s234 + $0xc] sm:$0xf]
  %v239 = vld [vmem:[%s234 + $0x10] sm:$0xf]
  %v240 = vld [vmem:[%s234 + $0x14] sm:$0xf]
  %v241 = vld [vmem:[%s234 + $0x18] sm:$0xf]
  %v242 = vld [vmem:[%s234 + $0x1c] sm:$0xf]
  %vm243 = vsmask.f32 6400
  %v244 = vrot.slane %v58, 1
  %v245 = vrot.slane %v60, 2
  %v246 = vor.u32 %v244, %v245
  %v247 = vrot.slane %v69, 1
  %v248 = vrot.slane %v65, 2
  %v249 = vor.u32 %v247, %v248
  %v250 = vsel %vm243, %v246, %v249
  %v251 = vshrl.u32 %v38, 16
  %v253 = vrot.slane %v251, 1
  %v254 = vrot.slane %v73, 2
  %v255 = vor.u32 %v253, %v254
  %v256 = vsel %vm243, %v249, %v255
  %v265 = vunpack.c.l.b16 %v235
  %v266 = vunpack.c.l.b16 %v236
  %v267 = vunpack.c.l.b16 %v237
  %v268 = vunpack.c.l.b16 %v238
  %v269 = vunpack.c.l.b16 %v239
  %v270 = vunpack.c.l.b16 %v240
  %v271 = vunpack.c.l.b16 %v241
  %v272 = vunpack.c.l.b16 %v242
  %v273 = vpack.c.b16 %v266, %v265
  %v274 = vpack.c.b16 %v268, %v267
  %v275 = vpack.c.b16 %v270, %v269
  %v276 = vpack.c.b16 %v272, %v271
  %v282 = vsel %vm101, %v250, 0
  %v285 = vsel %vm101, %v256, 0
  %287 = vmatprep.subr.bf16.mxu0 0
  %288 = vmatpush1.bf16.msra.mxu0 %v273
  %289 = vmatprep.subr.bf16.mxu0 0
  %290 = vmatpush1.bf16.msra.mxu0 %v274
  %291 = vmatprep.subr.bf16.mxu0 0
  %292 = vmatpush1.bf16.msra.mxu0 %v275
  %293 = vmatprep.subr.bf16.mxu0 0
  %294 = vmatpush1.bf16.msra.mxu0 %v276
  %295 = vmatprep.subr.bf16.mxu0 0
  %296 = vmatpush1.bf16.msra.mxu0 0
  %297 = vmatprep.subr.bf16.mxu0 0
  %298 = vmatpush1.bf16.msra.mxu0 0
  %299 = vmatprep.subr.bf16.mxu0 0
  %300 = vmatpush1.bf16.msra.mxu0 0
  %301 = vmatprep.subr.bf16.mxu0 0
  %302 = vmatpush1.bf16.msra.mxu0 0
  %303 = vmatprep.subr.bf16.mxu0 0
  %304 = vmatpush1.bf16.msra.mxu0 0
  %305 = vmatprep.subr.bf16.mxu0 0
  %306 = vmatpush1.bf16.msra.mxu0 0
  %307 = vmatprep.subr.bf16.mxu0 0
  %308 = vmatpush1.bf16.msra.mxu0 0
  %309 = vmatprep.subr.bf16.mxu0 0
  %310 = vmatpush1.bf16.msra.mxu0 0
  %311 = vmatprep.subr.bf16.mxu0 0
  %312 = vmatpush1.bf16.msra.mxu0 0
  %313 = vmatprep.subr.bf16.mxu0 0
  %314 = vmatpush1.bf16.msra.mxu0 0
  %315 = vmatprep.subr.bf16.mxu0 0
  %316 = vmatpush1.bf16.msra.mxu0 0
  %317 = vmatprep.subr.bf16.mxu0 0
  %318 = vmatpush1.bf16.msra.mxu0 0
  %319 = vmatprep.mubr.bf16.mxu0 0
  %320 = vmatmul.mubr.bf16.gmra.mrb[0].mxu0 %v282
  %v321 = vpop.f32.mrb[0].mxu0
  %v322 = vadd.f32 0.0, %v321
  %v323 = vpop.f32.mrb[0].mxu0
  %v324 = vpop.f32.mrb[0].mxu0
  %v325 = vadd.f32 0.0, %v324
  %v326 = vpop.f32.mrb[0].mxu0
  %327 = vmatprep.mubr.bf16.mxu0 0
  %328 = vmatmul.mubr.bf16.gmra.mrb[0].mxu0 %v285
  %v329 = vpop.f32.mrb[0].mxu0
  %v330 = vadd.f32 0.0, %v329
  %v331 = vpop.f32.mrb[0].mxu0
  %v332 = vpop.f32.mrb[0].mxu0
  %v333 = vadd.f32 0.0, %v332
  %v334 = vpop.f32.mrb[0].mxu0
  %335 = vdwg.mxu0
  %v336 = vadd.f32 %v220, %v322
  %v337 = vadd.f32 %v223, %v325
  %v338 = vadd.f32 %v228, %v330
  %v339 = vadd.f32 %v231, %v333
  %s340 = scalar_lea.vmem %s2, 96
  %v341 = vld [vmem:[%s340] sm:$0xf]
  %v342 = vld [vmem:[%s340 + $0x4] sm:$0xf]
  %v343 = vld [vmem:[%s340 + $0x8] sm:$0xf]
  %v344 = vld [vmem:[%s340 + $0xc] sm:$0xf]
  %v345 = vld [vmem:[%s340 + $0x10] sm:$0xf]
  %v346 = vld [vmem:[%s340 + $0x14] sm:$0xf]
  %v347 = vld [vmem:[%s340 + $0x18] sm:$0xf]
  %v348 = vld [vmem:[%s340 + $0x1c] sm:$0xf]
  %vm349 = vcmask 1045504
  %v350 = vrot.slane %v32, 2
  %v351 = vrot.slane %v33, 2
  %v352 = vsel %vm349, %v350, %v351
  %v353 = vrot.slane %v38, 2
  %v354 = vsel %vm349, %v351, %v353
  %v363 = vunpack.c.l.b16 %v341
  %v364 = vunpack.c.l.b16 %v342
  %v365 = vunpack.c.l.b16 %v343
  %v366 = vunpack.c.l.b16 %v344
  %v367 = vunpack.c.l.b16 %v345
  %v368 = vunpack.c.l.b16 %v346
  %v369 = vunpack.c.l.b16 %v347
  %v370 = vunpack.c.l.b16 %v348
  %v371 = vpack.c.b16 %v364, %v363
  %v372 = vpack.c.b16 %v366, %v365
  %v373 = vpack.c.b16 %v368, %v367
  %v374 = vpack.c.b16 %v370, %v369
  %v380 = vsel %vm101, %v352, 0
  %v383 = vsel %vm101, %v354, 0
  %385 = vmatprep.subr.bf16.mxu0 0
  %386 = vmatpush1.bf16.msra.mxu0 %v371
  %387 = vmatprep.subr.bf16.mxu0 0
  %388 = vmatpush1.bf16.msra.mxu0 %v372
  %389 = vmatprep.subr.bf16.mxu0 0
  %390 = vmatpush1.bf16.msra.mxu0 %v373
  %391 = vmatprep.subr.bf16.mxu0 0
  %392 = vmatpush1.bf16.msra.mxu0 %v374
  %393 = vmatprep.subr.bf16.mxu0 0
  %394 = vmatpush1.bf16.msra.mxu0 0
  %395 = vmatprep.subr.bf16.mxu0 0
  %396 = vmatpush1.bf16.msra.mxu0 0
  %397 = vmatprep.subr.bf16.mxu0 0
  %398 = vmatpush1.bf16.msra.mxu0 0
  %399 = vmatprep.subr.bf16.mxu0 0
  %400 = vmatpush1.bf16.msra.mxu0 0
  %401 = vmatprep.subr.bf16.mxu0 0
  %402 = vmatpush1.bf16.msra.mxu0 0
  %403 = vmatprep.subr.bf16.mxu0 0
  %404 = vmatpush1.bf16.msra.mxu0 0
  %405 = vmatprep.subr.bf16.mxu0 0
  %406 = vmatpush1.bf16.msra.mxu0 0
  %407 = vmatprep.subr.bf16.mxu0 0
  %408 = vmatpush1.bf16.msra.mxu0 0
  %409 = vmatprep.subr.bf16.mxu0 0
  %410 = vmatpush1.bf16.msra.mxu0 0
  %411 = vmatprep.subr.bf16.mxu0 0
  %412 = vmatpush1.bf16.msra.mxu0 0
  %413 = vmatprep.subr.bf16.mxu0 0
  %414 = vmatpush1.bf16.msra.mxu0 0
  %415 = vmatprep.subr.bf16.mxu0 0
  %416 = vmatpush1.bf16.msra.mxu0 0
  %417 = vmatprep.mubr.bf16.mxu0 0
  %418 = vmatmul.mubr.bf16.gmra.mrb[0].mxu0 %v380
  %v419 = vpop.f32.mrb[0].mxu0
  %v420 = vadd.f32 0.0, %v419
  %v421 = vpop.f32.mrb[0].mxu0
  %v422 = vpop.f32.mrb[0].mxu0
  %v423 = vadd.f32 0.0, %v422
  %v424 = vpop.f32.mrb[0].mxu0
  %425 = vmatprep.mubr.bf16.mxu0 0
  %426 = vmatmul.mubr.bf16.gmra.mrb[0].mxu0 %v383
  %v427 = vpop.f32.mrb[0].mxu0
  %v428 = vadd.f32 0.0, %v427
  %v429 = vpop.f32.mrb[0].mxu0
  %v430 = vpop.f32.mrb[0].mxu0
  %v431 = vadd.f32 0.0, %v430
  %v432 = vpop.f32.mrb[0].mxu0
  %433 = vdwg.mxu0
  %v434 = vadd.f32 %v336, %v420
  %v435 = vadd.f32 %v337, %v423
  %v436 = vadd.f32 %v338, %v428
  %v437 = vadd.f32 %v339, %v431
  %v438 = vld [vmem:[%s3] sm:$0x1]
  %v440 = vlaneseq
  %v441 = vshrl.u32 %v440, 7
  %v442 = vsub.s32 0, %v441
  %v443 = vrot.slane %v438, %v442
  %v445 = vadd.f32 %v434, %v443
  %v446 = vadd.f32 %v435, %v443
  %v447 = vadd.f32 %v436, %v443
  %v448 = vadd.f32 %v437, %v443
  %v449 = vmax.f32 %v445, 0.0
  %v450 = vmax.f32 %v446, 0.0
  %v451 = vmax.f32 %v447, 0.0
  %v452 = vmax.f32 %v448, 0.0
  %v453 = vpack.c.bf16 %v450, %v449
  %v454 = vpack.c.bf16 %v452, %v451
  %v457 = vunpack.c.l.b16 %v453
  %v458 = vunpack.c.h.b16 %v453
  %v459 = vunpack.c.l.b16 %v454
  %v460 = vunpack.c.h.b16 %v454
  %v461 = vpack.c.b16 %v457, %v457
  %v462 = vpack.c.b16 %v458, %v458
  %v463 = vpack.c.b16 %v459, %v459
  %v464 = vpack.c.b16 %v460, %v460
  %vm469 = vcmask 257024
  %470 = vst.msk [vmem:[%s4] sm:$0xf] %vm469, %v461
  %471 = vst.msk [vmem:[%s4 + $0x4] sm:$0xf] %vm469, %v462
  %472 = vst.msk [vmem:[%s4 + $0x8] sm:$0xf] %vm469, %v463
  %473 = vst.msk [vmem:[%s4 + $0xc] sm:$0xf] %vm469, %v464
  // Predicated region
  $region18: #{_forward_impl.6} parent=0 // pred_check
    _
  $region19: #{_forward_impl.6} parent=0 // pred_check_branch
    %475 = sbr.rel (0) target = $region21
  $region20: #{_forward_impl.6} parent=0 // pred_region
    _
  $region21: #{_forward_impl.6} parent=0 // pred_fallthru
    _
  // Predicated region
  $region22: #{_forward_impl.6} parent=0 // pred_check
    _
  $region23: #{_forward_impl.6} parent=0 // pred_check_branch
    %477 = sbr.rel (0) target = $region25
  $region24: #{_forward_impl.6} parent=0 // pred_region
    _
  $region25: #{_forward_impl.6} parent=0 // pred_fallthru
    _

// kernel: _forward_impl.7
$region0: #{_forward_impl.7}
  #allocation0 [shape = 'u32[]', space=smem, size = 0x4, offset = 0x4, fixed_abs, tag = 'smem constant byte address 0x4 - core index']
  #allocation1 [shape = 'u32[144,128]{1,0:T(1,128)}', space=vmem, size = 0x12000, scoped, tag = 'internal scratch']
  %s0 = inlined_call_operand.vmem [shape: bf16[32,128], index: 0, kind: input, shape index: {}]
  %s1 = inlined_call_operand.vmem [shape: bf16[1,16,128], index: 1, kind: input, shape index: {}]
  %s2 = inlined_call_operand.vmem [shape: bf16[4,128,64], index: 2, kind: input, shape index: {}]
  %s3 = inlined_call_operand.vmem [shape: f32[1,64], index: 3, kind: input, shape index: {}]
  %s4 = inlined_call_operand.vmem [shape: bf16[16,64], index: 4, kind: output, shape index: {}]
  %s5 = sld [smem:[#allocation0]]
  $region26: #{_forward_impl.7} parent=0
    _
  %s7 = ssub.s32 1, %s5
  %s8 = scalar_select 0, %s7, %s5
  // Predicated region
  $region2: #{_forward_impl.7} parent=0 // pred_check
    _
  $region3: #{_forward_impl.7} parent=0 // pred_check_branch
    %10 = sbr.rel (0) target = $region5
  $region4: #{_forward_impl.7} parent=0 // pred_region
    _
  $region5: #{_forward_impl.7} parent=0 // pred_fallthru
    _
  // Predicated region
  $region6: #{_forward_impl.7} parent=0 // pred_check
    _
  $region7: #{_forward_impl.7} parent=0 // pred_check_branch
    %12 = sbr.rel (0) target = $region9
  $region8: #{_forward_impl.7} parent=0 // pred_region
    _
  $region9: #{_forward_impl.7} parent=0 // pred_fallthru
    _
  // Predicated region
  $region10: #{_forward_impl.7} parent=0 // pred_check
    _
  $region11: #{_forward_impl.7} parent=0 // pred_check_branch
    %14 = sbr.rel (0) target = $region13
  $region12: #{_forward_impl.7} parent=0 // pred_region
    _
  $region13: #{_forward_impl.7} parent=0 // pred_fallthru
    _
  // Predicated region
  $region14: #{_forward_impl.7} parent=0 // pred_check
    _
  $region15: #{_forward_impl.7} parent=0 // pred_check_branch
    %16 = sbr.rel (0) target = $region17
  $region16: #{_forward_impl.7} parent=0 // pred_region
    _
  $region17: #{_forward_impl.7} parent=0 // pred_fallthru
    _
  %v18 = vld [vmem:[%s0] sm:$0xf]
  %v19 = vld [vmem:[%s0 + $0x4] sm:$0xf]
  %v20 = vld [vmem:[%s1] sm:$0xf]
  %v21 = vld [vmem:[%s1 + $0x4] sm:$0xf]
  %v24 = vunpack.c.l.b16 %v18
  %v25 = vunpack.c.l.b16 %v19
  %v26 = vpack.c.b16 %v25, %v24
  %v30 = vunpack.c.l.b16 %v20
  %v31 = vunpack.c.l.b16 %v21
  %v32 = vpack.c.b16 %v31, %v30
  %v33 = vld [vmem:[%s2] sm:$0xf]
  %v34 = vld [vmem:[%s2 + $0x4] sm:$0xf]
  %v35 = vld [vmem:[%s2 + $0x8] sm:$0xf]
  %v36 = vld [vmem:[%s2 + $0xc] sm:$0xf]
  %v37 = vld [vmem:[%s2 + $0x10] sm:$0xf]
  %v38 = vld [vmem:[%s2 + $0x14] sm:$0xf]
  %v39 = vld [vmem:[%s2 + $0x18] sm:$0xf]
  %v40 = vld [vmem:[%s2 + $0x1c] sm:$0xf]
  %v41 = vld [vmem:[%s2 + $0x20] sm:$0xf]
  %v42 = vld [vmem:[%s2 + $0x24] sm:$0xf]
  %v43 = vld [vmem:[%s2 + $0x28] sm:$0xf]
  %v44 = vld [vmem:[%s2 + $0x2c] sm:$0xf]
  %v45 = vld [vmem:[%s2 + $0x30] sm:$0xf]
  %v46 = vld [vmem:[%s2 + $0x34] sm:$0xf]
  %v47 = vld [vmem:[%s2 + $0x38] sm:$0xf]
  %v48 = vld [vmem:[%s2 + $0x3c] sm:$0xf]
  %s49 = scalar_lea.vmem %s2, 64
  %v50 = vld [vmem:[%s49] sm:$0xf]
  %v51 = vld [vmem:[%s49 + $0x4] sm:$0xf]
  %v52 = vld [vmem:[%s49 + $0x8] sm:$0xf]
  %v53 = vld [vmem:[%s49 + $0xc] sm:$0xf]
  %v54 = vld [vmem:[%s49 + $0x10] sm:$0xf]
  %v55 = vld [vmem:[%s49 + $0x14] sm:$0xf]
  %v56 = vld [vmem:[%s49 + $0x18] sm:$0xf]
  %v57 = vld [vmem:[%s49 + $0x1c] sm:$0xf]
  %v58 = vld [vmem:[%s49 + $0x20] sm:$0xf]
  %v59 = vld [vmem:[%s49 + $0x24] sm:$0xf]
  %v60 = vld [vmem:[%s49 + $0x28] sm:$0xf]
  %v61 = vld [vmem:[%s49 + $0x2c] sm:$0xf]
  %v62 = vld [vmem:[%s49 + $0x30] sm:$0xf]
  %v63 = vld [vmem:[%s49 + $0x34] sm:$0xf]
  %v64 = vld [vmem:[%s49 + $0x38] sm:$0xf]
  %v65 = vld [vmem:[%s49 + $0x3c] sm:$0xf]
  %vm66 = vsmask.f32 7424
  %v68 = vshrl.u32 %v26, 16
  %v70 = vshll.u32 %v26, 16
  %v72 = vrot.slane %v70, 1
  %v73 = vor.u32 %v68, %v72
  %v75 = vshll.u32 %v32, 16
  %v77 = vrot.slane %v75, 1
  %v78 = vsel %vm66, %v73, %v77
  %v96 = vunpack.c.l.b16 %v50
  %v97 = vunpack.c.l.b16 %v51
  %v98 = vunpack.c.l.b16 %v52
  %v99 = vunpack.c.l.b16 %v53
  %v100 = vunpack.c.l.b16 %v54
  %v101 = vunpack.c.l.b16 %v55
  %v102 = vunpack.c.l.b16 %v56
  %v103 = vunpack.c.l.b16 %v57
  %v104 = vunpack.c.l.b16 %v58
  %v105 = vunpack.c.l.b16 %v59
  %v106 = vunpack.c.l.b16 %v60
  %v107 = vunpack.c.l.b16 %v61
  %v108 = vunpack.c.l.b16 %v62
  %v109 = vunpack.c.l.b16 %v63
  %v110 = vunpack.c.l.b16 %v64
  %v111 = vunpack.c.l.b16 %v65
  %v112 = vpack.c.b16 %v97, %v96
  %v113 = vpack.c.b16 %v99, %v98
  %v114 = vpack.c.b16 %v101, %v100
  %v115 = vpack.c.b16 %v103, %v102
  %v116 = vpack.c.b16 %v105, %v104
  %v117 = vpack.c.b16 %v107, %v106
  %v118 = vpack.c.b16 %v109, %v108
  %v119 = vpack.c.b16 %v111, %v110
  %128 = vmatprep.subr.bf16.mxu0 0
  %129 = vmatpush1.bf16.msra.mxu0 %v112
  %130 = vmatprep.subr.bf16.mxu0 0
  %131 = vmatpush1.bf16.msra.mxu0 %v113
  %132 = vmatprep.subr.bf16.mxu0 0
  %133 = vmatpush1.bf16.msra.mxu0 %v114
  %134 = vmatprep.subr.bf16.mxu0 0
  %135 = vmatpush1.bf16.msra.mxu0 %v115
  %136 = vmatprep.subr.bf16.mxu0 0
  %137 = vmatpush1.bf16.msra.mxu0 %v116
  %138 = vmatprep.subr.bf16.mxu0 0
  %139 = vmatpush1.bf16.msra.mxu0 %v117
  %140 = vmatprep.subr.bf16.mxu0 0
  %141 = vmatpush1.bf16.msra.mxu0 %v118
  %142 = vmatprep.subr.bf16.mxu0 0
  %143 = vmatpush1.bf16.msra.mxu0 %v119
  %144 = vmatprep.subr.bf16.mxu0 0
  %145 = vmatpush1.bf16.msra.mxu0 0
  %146 = vmatprep.subr.bf16.mxu0 0
  %147 = vmatpush1.bf16.msra.mxu0 0
  %148 = vmatprep.subr.bf16.mxu0 0
  %149 = vmatpush1.bf16.msra.mxu0 0
  %150 = vmatprep.subr.bf16.mxu0 0
  %151 = vmatpush1.bf16.msra.mxu0 0
  %152 = vmatprep.subr.bf16.mxu0 0
  %153 = vmatpush1.bf16.msra.mxu0 0
  %154 = vmatprep.subr.bf16.mxu0 0
  %155 = vmatpush1.bf16.msra.mxu0 0
  %156 = vmatprep.subr.bf16.mxu0 0
  %157 = vmatpush1.bf16.msra.mxu0 0
  %158 = vmatprep.subr.bf16.mxu0 0
  %159 = vmatpush1.bf16.msra.mxu0 0
  %160 = vmatprep.mubr.bf16.mxu0 0
  %161 = vmatmul.mubr.bf16.gmra.mrb[0].mxu0 %v78
  %v162 = vpop.f32.mrb[0].mxu0
  %v163 = vadd.f32 0.0, %v162
  %v164 = vpop.f32.mrb[0].mxu0
  %v165 = vpop.f32.mrb[0].mxu0
  %v166 = vadd.f32 0.0, %v165
  %v167 = vpop.f32.mrb[0].mxu0
  %168 = vdwg.mxu0
  %v185 = vunpack.c.l.b16 %v33
  %v186 = vunpack.c.l.b16 %v34
  %v187 = vunpack.c.l.b16 %v35
  %v188 = vunpack.c.l.b16 %v36
  %v189 = vunpack.c.l.b16 %v37
  %v190 = vunpack.c.l.b16 %v38
  %v191 = vunpack.c.l.b16 %v39
  %v192 = vunpack.c.l.b16 %v40
  %v193 = vunpack.c.l.b16 %v41
  %v194 = vunpack.c.l.b16 %v42
  %v195 = vunpack.c.l.b16 %v43
  %v196 = vunpack.c.l.b16 %v44
  %v197 = vunpack.c.l.b16 %v45
  %v198 = vunpack.c.l.b16 %v46
  %v199 = vunpack.c.l.b16 %v47
  %v200 = vunpack.c.l.b16 %v48
  %v201 = vpack.c.b16 %v186, %v185
  %v202 = vpack.c.b16 %v188, %v187
  %v203 = vpack.c.b16 %v190, %v189
  %v204 = vpack.c.b16 %v192, %v191
  %v205 = vpack.c.b16 %v194, %v193
  %v206 = vpack.c.b16 %v196, %v195
  %v207 = vpack.c.b16 %v198, %v197
  %v208 = vpack.c.b16 %v200, %v199
  %217 = vmatprep.subr.bf16.mxu0 0
  %218 = vmatpush1.bf16.msra.mxu0 %v201
  %219 = vmatprep.subr.bf16.mxu0 0
  %220 = vmatpush1.bf16.msra.mxu0 %v202
  %221 = vmatprep.subr.bf16.mxu0 0
  %222 = vmatpush1.bf16.msra.mxu0 %v203
  %223 = vmatprep.subr.bf16.mxu0 0
  %224 = vmatpush1.bf16.msra.mxu0 %v204
  %225 = vmatprep.subr.bf16.mxu0 0
  %226 = vmatpush1.bf16.msra.mxu0 %v205
  %227 = vmatprep.subr.bf16.mxu0 0
  %228 = vmatpush1.bf16.msra.mxu0 %v206
  %229 = vmatprep.subr.bf16.mxu0 0
  %230 = vmatpush1.bf16.msra.mxu0 %v207
  %231 = vmatprep.subr.bf16.mxu0 0
  %232 = vmatpush1.bf16.msra.mxu0 %v208
  %233 = vmatprep.subr.bf16.mxu0 0
  %234 = vmatpush1.bf16.msra.mxu0 0
  %235 = vmatprep.subr.bf16.mxu0 0
  %236 = vmatpush1.bf16.msra.mxu0 0
  %237 = vmatprep.subr.bf16.mxu0 0
  %238 = vmatpush1.bf16.msra.mxu0 0
  %239 = vmatprep.subr.bf16.mxu0 0
  %240 = vmatpush1.bf16.msra.mxu0 0
  %241 = vmatprep.subr.bf16.mxu0 0
  %242 = vmatpush1.bf16.msra.mxu0 0
  %243 = vmatprep.subr.bf16.mxu0 0
  %244 = vmatpush1.bf16.msra.mxu0 0
  %245 = vmatprep.subr.bf16.mxu0 0
  %246 = vmatpush1.bf16.msra.mxu0 0
  %247 = vmatprep.subr.bf16.mxu0 0
  %248 = vmatpush1.bf16.msra.mxu0 0
  %249 = vmatprep.mubr.bf16.mxu0 0
  %250 = vmatmul.mubr.bf16.gmra.mrb[0].mxu0 %v26
  %v251 = vpop.f32.mrb[0].mxu0
  %v252 = vadd.f32 %v163, %v251
  %v253 = vpop.f32.mrb[0].mxu0
  %v254 = vpop.f32.mrb[0].mxu0
  %v255 = vadd.f32 %v166, %v254
  %v256 = vpop.f32.mrb[0].mxu0
  %257 = vdwg.mxu0
  %s258 = scalar_lea.vmem %s2, 128
  %v259 = vld [vmem:[%s258] sm:$0xf]
  %v260 = vld [vmem:[%s258 + $0x4] sm:$0xf]
  %v261 = vld [vmem:[%s258 + $0x8] sm:$0xf]
  %v262 = vld [vmem:[%s258 + $0xc] sm:$0xf]
  %v263 = vld [vmem:[%s258 + $0x10] sm:$0xf]
  %v264 = vld [vmem:[%s258 + $0x14] sm:$0xf]
  %v265 = vld [vmem:[%s258 + $0x18] sm:$0xf]
  %v266 = vld [vmem:[%s258 + $0x1c] sm:$0xf]
  %v267 = vld [vmem:[%s258 + $0x20] sm:$0xf]
  %v268 = vld [vmem:[%s258 + $0x24] sm:$0xf]
  %v269 = vld [vmem:[%s258 + $0x28] sm:$0xf]
  %v270 = vld [vmem:[%s258 + $0x2c] sm:$0xf]
  %v271 = vld [vmem:[%s258 + $0x30] sm:$0xf]
  %v272 = vld [vmem:[%s258 + $0x34] sm:$0xf]
  %v273 = vld [vmem:[%s258 + $0x38] sm:$0xf]
  %v274 = vld [vmem:[%s258 + $0x3c] sm:$0xf]
  %vm275 = vcmask 1046528
  %v276 = vrot.slane %v26, 1
  %v277 = vrot.slane %v32, 1
  %v278 = vsel %vm275, %v276, %v277
  %v296 = vunpack.c.l.b16 %v259
  %v297 = vunpack.c.l.b16 %v260
  %v298 = vunpack.c.l.b16 %v261
  %v299 = vunpack.c.l.b16 %v262
  %v300 = vunpack.c.l.b16 %v263
  %v301 = vunpack.c.l.b16 %v264
  %v302 = vunpack.c.l.b16 %v265
  %v303 = vunpack.c.l.b16 %v266
  %v304 = vunpack.c.l.b16 %v267
  %v305 = vunpack.c.l.b16 %v268
  %v306 = vunpack.c.l.b16 %v269
  %v307 = vunpack.c.l.b16 %v270
  %v308 = vunpack.c.l.b16 %v271
  %v309 = vunpack.c.l.b16 %v272
  %v310 = vunpack.c.l.b16 %v273
  %v311 = vunpack.c.l.b16 %v274
  %v312 = vpack.c.b16 %v297, %v296
  %v313 = vpack.c.b16 %v299, %v298
  %v314 = vpack.c.b16 %v301, %v300
  %v315 = vpack.c.b16 %v303, %v302
  %v316 = vpack.c.b16 %v305, %v304
  %v317 = vpack.c.b16 %v307, %v306
  %v318 = vpack.c.b16 %v309, %v308
  %v319 = vpack.c.b16 %v311, %v310
  %328 = vmatprep.subr.bf16.mxu0 0
  %329 = vmatpush1.bf16.msra.mxu0 %v312
  %330 = vmatprep.subr.bf16.mxu0 0
  %331 = vmatpush1.bf16.msra.mxu0 %v313
  %332 = vmatprep.subr.bf16.mxu0 0
  %333 = vmatpush1.bf16.msra.mxu0 %v314
  %334 = vmatprep.subr.bf16.mxu0 0
  %335 = vmatpush1.bf16.msra.mxu0 %v315
  %336 = vmatprep.subr.bf16.mxu0 0
  %337 = vmatpush1.bf16.msra.mxu0 %v316
  %338 = vmatprep.subr.bf16.mxu0 0
  %339 = vmatpush1.bf16.msra.mxu0 %v317
  %340 = vmatprep.subr.bf16.mxu0 0
  %341 = vmatpush1.bf16.msra.mxu0 %v318
  %342 = vmatprep.subr.bf16.mxu0 0
  %343 = vmatpush1.bf16.msra.mxu0 %v319
  %344 = vmatprep.subr.bf16.mxu0 0
  %345 = vmatpush1.bf16.msra.mxu0 0
  %346 = vmatprep.subr.bf16.mxu0 0
  %347 = vmatpush1.bf16.msra.mxu0 0
  %348 = vmatprep.subr.bf16.mxu0 0
  %349 = vmatpush1.bf16.msra.mxu0 0
  %350 = vmatprep.subr.bf16.mxu0 0
  %351 = vmatpush1.bf16.msra.mxu0 0
  %352 = vmatprep.subr.bf16.mxu0 0
  %353 = vmatpush1.bf16.msra.mxu0 0
  %354 = vmatprep.subr.bf16.mxu0 0
  %355 = vmatpush1.bf16.msra.mxu0 0
  %356 = vmatprep.subr.bf16.mxu0 0
  %357 = vmatpush1.bf16.msra.mxu0 0
  %358 = vmatprep.subr.bf16.mxu0 0
  %359 = vmatpush1.bf16.msra.mxu0 0
  %360 = vmatprep.mubr.bf16.mxu0 0
  %361 = vmatmul.mubr.bf16.gmra.mrb[0].mxu0 %v278
  %v362 = vpop.f32.mrb[0].mxu0
  %v363 = vadd.f32 0.0, %v362
  %v364 = vpop.f32.mrb[0].mxu0
  %v365 = vpop.f32.mrb[0].mxu0
  %v366 = vadd.f32 0.0, %v365
  %v367 = vpop.f32.mrb[0].mxu0
  %368 = vdwg.mxu0
  %v369 = vadd.f32 %v252, %v363
  %v370 = vadd.f32 %v255, %v366
  %s371 = scalar_lea.vmem %s2, 192
  %v372 = vld [vmem:[%s371] sm:$0xf]
  %v373 = vld [vmem:[%s371 + $0x4] sm:$0xf]
  %v374 = vld [vmem:[%s371 + $0x8] sm:$0xf]
  %v375 = vld [vmem:[%s371 + $0xc] sm:$0xf]
  %v376 = vld [vmem:[%s371 + $0x10] sm:$0xf]
  %v377 = vld [vmem:[%s371 + $0x14] sm:$0xf]
  %v378 = vld [vmem:[%s371 + $0x18] sm:$0xf]
  %v379 = vld [vmem:[%s371 + $0x1c] sm:$0xf]
  %v380 = vld [vmem:[%s371 + $0x20] sm:$0xf]
  %v381 = vld [vmem:[%s371 + $0x24] sm:$0xf]
  %v382 = vld [vmem:[%s371 + $0x28] sm:$0xf]
  %v383 = vld [vmem:[%s371 + $0x2c] sm:$0xf]
  %v384 = vld [vmem:[%s371 + $0x30] sm:$0xf]
  %v385 = vld [vmem:[%s371 + $0x34] sm:$0xf]
  %v386 = vld [vmem:[%s371 + $0x38] sm:$0xf]
  %v387 = vld [vmem:[%s371 + $0x3c] sm:$0xf]
  %vm388 = vsmask.f32 6400
  %v389 = vrot.slane %v68, 1
  %v390 = vrot.slane %v70, 2
  %v391 = vor.u32 %v389, %v390
  %v392 = vshrl.u32 %v32, 16
  %v394 = vrot.slane %v392, 1
  %v395 = vrot.slane %v75, 2
  %v396 = vor.u32 %v394, %v395
  %v397 = vsel %vm388, %v391, %v396
  %v415 = vunpack.c.l.b16 %v372
  %v416 = vunpack.c.l.b16 %v373
  %v417 = vunpack.c.l.b16 %v374
  %v418 = vunpack.c.l.b16 %v375
  %v419 = vunpack.c.l.b16 %v376
  %v420 = vunpack.c.l.b16 %v377
  %v421 = vunpack.c.l.b16 %v378
  %v422 = vunpack.c.l.b16 %v379
  %v423 = vunpack.c.l.b16 %v380
  %v424 = vunpack.c.l.b16 %v381
  %v425 = vunpack.c.l.b16 %v382
  %v426 = vunpack.c.l.b16 %v383
  %v427 = vunpack.c.l.b16 %v384
  %v428 = vunpack.c.l.b16 %v385
  %v429 = vunpack.c.l.b16 %v386
  %v430 = vunpack.c.l.b16 %v387
  %v431 = vpack.c.b16 %v416, %v415
  %v432 = vpack.c.b16 %v418, %v417
  %v433 = vpack.c.b16 %v420, %v419
  %v434 = vpack.c.b16 %v422, %v421
  %v435 = vpack.c.b16 %v424, %v423
  %v436 = vpack.c.b16 %v426, %v425
  %v437 = vpack.c.b16 %v428, %v427
  %v438 = vpack.c.b16 %v430, %v429
  %447 = vmatprep.subr.bf16.mxu0 0
  %448 = vmatpush1.bf16.msra.mxu0 %v431
  %449 = vmatprep.subr.bf16.mxu0 0
  %450 = vmatpush1.bf16.msra.mxu0 %v432
  %451 = vmatprep.subr.bf16.mxu0 0
  %452 = vmatpush1.bf16.msra.mxu0 %v433
  %453 = vmatprep.subr.bf16.mxu0 0
  %454 = vmatpush1.bf16.msra.mxu0 %v434
  %455 = vmatprep.subr.bf16.mxu0 0
  %456 = vmatpush1.bf16.msra.mxu0 %v435
  %457 = vmatprep.subr.bf16.mxu0 0
  %458 = vmatpush1.bf16.msra.mxu0 %v436
  %459 = vmatprep.subr.bf16.mxu0 0
  %460 = vmatpush1.bf16.msra.mxu0 %v437
  %461 = vmatprep.subr.bf16.mxu0 0
  %462 = vmatpush1.bf16.msra.mxu0 %v438
  %463 = vmatprep.subr.bf16.mxu0 0
  %464 = vmatpush1.bf16.msra.mxu0 0
  %465 = vmatprep.subr.bf16.mxu0 0
  %466 = vmatpush1.bf16.msra.mxu0 0
  %467 = vmatprep.subr.bf16.mxu0 0
  %468 = vmatpush1.bf16.msra.mxu0 0
  %469 = vmatprep.subr.bf16.mxu0 0
  %470 = vmatpush1.bf16.msra.mxu0 0
  %471 = vmatprep.subr.bf16.mxu0 0
  %472 = vmatpush1.bf16.msra.mxu0 0
  %473 = vmatprep.subr.bf16.mxu0 0
  %474 = vmatpush1.bf16.msra.mxu0 0
  %475 = vmatprep.subr.bf16.mxu0 0
  %476 = vmatpush1.bf16.msra.mxu0 0
  %477 = vmatprep.subr.bf16.mxu0 0
  %478 = vmatpush1.bf16.msra.mxu0 0
  %479 = vmatprep.mubr.bf16.mxu0 0
  %480 = vmatmul.mubr.bf16.gmra.mrb[0].mxu0 %v397
  %v481 = vpop.f32.mrb[0].mxu0
  %v482 = vadd.f32 0.0, %v481
  %v483 = vpop.f32.mrb[0].mxu0
  %v484 = vpop.f32.mrb[0].mxu0
  %v485 = vadd.f32 0.0, %v484
  %v486 = vpop.f32.mrb[0].mxu0
  %487 = vdwg.mxu0
  %v488 = vadd.f32 %v369, %v482
  %v489 = vadd.f32 %v370, %v485
  %v490 = vld [vmem:[%s3] sm:$0x1]
  %v492 = vlaneseq
  %v493 = vshrl.u32 %v492, 7
  %v494 = vsub.s32 0, %v493
  %v495 = vrot.slane %v490, %v494
  %v497 = vadd.f32 %v488, %v495
  %v498 = vadd.f32 %v489, %v495
  %v499 = vmax.f32 %v497, 0.0
  %v500 = vmax.f32 %v498, 0.0
  %v501 = vpack.c.bf16 %v500, %v499
  %v503 = vunpack.c.l.b16 %v501
  %v504 = vunpack.c.h.b16 %v501
  %v505 = vpack.c.b16 %v503, %v503
  %v506 = vpack.c.b16 %v504, %v504
  %vm509 = vcmask 519168
  %510 = vst.msk [vmem:[%s4] sm:$0xf] %vm509, %v505
  %511 = vst.msk [vmem:[%s4 + $0x4] sm:$0xf] %vm509, %v506
  // Predicated region
  $region18: #{_forward_impl.7} parent=0 // pred_check
    _
  $region19: #{_forward_impl.7} parent=0 // pred_check_branch
    %513 = sbr.rel (0) target = $region21
  $region20: #{_forward_impl.7} parent=0 // pred_region
    _
  $region21: #{_forward_impl.7} parent=0 // pred_fallthru
    _
  // Predicated region
  $region22: #{_forward_impl.7} parent=0 // pred_check
    _
  $region23: #{_forward_impl.7} parent=0 // pred_check_branch
    %515 = sbr.rel (0) target = $region25
  $region24: #{_forward_impl.7} parent=0 // pred_region
    _
  $region25: #{_forward_impl.7} parent=0 // pred_fallthru
    _

</llo_original>
